<compile_context>
chip_gen: v7x
topology: tpu7x:2x2x1
jax: 0.10.0
libtpu: 0.0.40
codegen_flags: <defaults>
</compile_context>

<pallas_src>
import jax
import jax.numpy as jnp
from jax.experimental import pallas as pl
from jax.experimental.pallas import tpu as pltpu

K_RAW = 3 * 15 * 15      # 675
K_PAD = 768              # 6 * 128 lanes
HIDDEN = 1024
NUM_CLASSES = 2
FC2_LANES = 128          # lane-padded width for the tiny FC2 MXU pass


def eznet_kernel(x_ref, w1_ref, b1_ref, w2d_ref, b2d_ref, o_ref):
    # x_ref  : (TM, 768)      bf16  flattened + K-padded NCHW patch block
    # w1_ref : (768, 1024)    bf16  conv weights (reshaped, transposed, K-padded)
    # b1_ref : (1, 1024)      f32
    # w2d_ref: (1024, 128)    bf16  fc difference vector (w2[1]-w2[0]) in lane 0
    # b2d_ref: (1, 1)         f32   fc bias difference (b2[1]-b2[0])
    # o_ref  : (TM, 2)        f32   log-probabilities

    # conv1-as-matmul + bias + ReLU: bf16 MXU operands, f32 accumulation.
    h = jnp.dot(x_ref[...], w1_ref[...], preferred_element_type=jnp.float32)
    h = jnp.maximum(h + b1_ref[...], 0.0)

    # fc1 collapsed to the 2-class difference logit and run as a small second
    # MXU pass; the VPU broadcast-multiply + XLU lane-reduce epilogue is gone.
    d_full = jnp.dot(h.astype(jnp.bfloat16), w2d_ref[...],
                     preferred_element_type=jnp.float32)        # (TM, 128)
    d = d_full[:, 0:1] + b2d_ref[...]                           # (TM, 1)

    # 2-class log_softmax: out = [-softplus(d), d - softplus(d)] with a
    # numerically stable softplus.
    sp = jnp.maximum(d, 0.0) + jnp.log(1.0 + jnp.exp(-jnp.abs(d)))
    o_ref[:, 0:1] = -sp
    o_ref[:, 1:2] = d - sp


def _round_up(v, m):
    return ((v + m - 1) // m) * m


def _pick_batch_tile(n):
    """Batch tile: multiple of 8, capped at 1024, >=2 grid steps when useful."""
    tm_max = 1024
    if n <= 16:
        return max(8, _round_up(n, 8))
    if n <= 2 * tm_max:
        # Split the batch so ("parallel",) can use both v7x TensorCores; keep
        # the tile an MXU-friendly multiple of 256.
        return min(tm_max, _round_up((n + 1) // 2, 256))
    return tm_max


def eznet_forward(x_nchw, w1, b1, w2, b2):
    """x_nchw: (N, 3, 15, 15) float32. Returns (N, 2) log-probabilities."""
    N, C, H, W = x_nchw.shape
    assert (C, H, W) == (3, 15, 15), "EZNet requires 3x15x15 inputs (conv -> 1x1)"

    # ---- wrapper glue: flatten / pad / cast (cheap XLA ops) ----
    x_flat = x_nchw.reshape(N, K_RAW)
    x_flat = jnp.pad(x_flat, ((0, 0), (0, K_PAD - K_RAW))).astype(jnp.bfloat16)

    w1_flat = w1.reshape(HIDDEN, K_RAW).T                        # (675, 1024)
    w1_flat = jnp.pad(w1_flat, ((0, K_PAD - K_RAW), (0, 0))).astype(jnp.bfloat16)

    b1_2d = b1.reshape(1, HIDDEN).astype(jnp.float32)

    # fc1 folded into a single difference vector (exact: log_softmax of a
    # 2-class linear layer depends only on z1 - z0), lane-padded for the MXU.
    w2d = (w2[1] - w2[0]).astype(jnp.float32)                    # (1024,)
    w2d_pad = jnp.zeros((HIDDEN, FC2_LANES), jnp.bfloat16)
    w2d_pad = w2d_pad.at[:, 0].set(w2d.astype(jnp.bfloat16))
    b2d_2d = (b2[1] - b2[0]).reshape(1, 1).astype(jnp.float32)

    # ---- batch tiling: weights resident across grid, x blocks streamed ----
    TM = _pick_batch_tile(N)
    n_blocks = pl.cdiv(N, TM)
    N_pad = n_blocks * TM
    if N_pad != N:
        x_flat = jnp.pad(x_flat, ((0, N_pad - N), (0, 0)))

    flops = (2 * N_pad * K_PAD * HIDDEN            # conv-as-matmul
             + 2 * N_pad * HIDDEN * FC2_LANES      # fc2 difference-logit matmul
             + 6 * N_pad * HIDDEN)                 # bias / relu / cast
    bytes_accessed = (x_flat.size * 2 + w1_flat.size * 2
                      + b1_2d.size * 4 + w2d_pad.size * 2 + b2d_2d.size * 4
                      + N_pad * NUM_CLASSES * 4)

    out = pl.pallas_call(
        eznet_kernel,
        out_shape=jax.ShapeDtypeStruct((N_pad, NUM_CLASSES), jnp.float32),
        grid=(n_blocks,),
        in_specs=[
            pl.BlockSpec((TM, K_PAD), lambda i: (i, 0)),           # x: streamed
            pl.BlockSpec((K_PAD, HIDDEN), lambda i: (0, 0)),       # w1: resident
            pl.BlockSpec((1, HIDDEN), lambda i: (0, 0)),           # b1: resident
            pl.BlockSpec((HIDDEN, FC2_LANES), lambda i: (0, 0)),   # w2d: resident
            pl.BlockSpec((1, 1), lambda i: (0, 0)),                # b2d: resident
        ],
        out_specs=pl.BlockSpec((TM, NUM_CLASSES), lambda i: (i, 0)),
        compiler_params=pltpu.CompilerParams(
            dimension_semantics=("parallel",),
            vmem_limit_bytes=48 * 1024 * 1024),
        cost_estimate=pl.CostEstimate(
            flops=flops,
            transcendentals=2 * N_pad,
            bytes_accessed=bytes_accessed),
    )(x_flat, w1_flat, b1_2d, w2d_pad, b2d_2d)
    return out[:N]


def init_params(key):
    """Deterministic parameter init matching the PyTorch module's shapes."""
    k1, k2, k3, k4 = jax.random.split(key, 4)
    bound1 = 1.0 / jnp.sqrt(K_RAW)
    bound2 = 1.0 / jnp.sqrt(HIDDEN)
    w1 = jax.random.uniform(k1, (HIDDEN, 3, 15, 15), jnp.float32, -bound1, bound1)
    b1 = jax.random.uniform(k2, (HIDDEN,), jnp.float32, -bound1, bound1)
    w2 = jax.random.uniform(k3, (NUM_CLASSES, HIDDEN), jnp.float32, -bound2, bound2)
    b2 = jax.random.uniform(k4, (NUM_CLASSES,), jnp.float32, -bound2, bound2)
    return w1, b1, w2, b2


if __name__ == "__main__":
    key = jax.random.PRNGKey(0)
    kx, kp = jax.random.split(key)

    # Small deterministic input: batch=2, NCHW = (2, 3, 15, 15)
    x = jax.random.normal(kx, (2, 3, 15, 15), jnp.float32)
    w1, b1, w2, b2 = init_params(kp)

    out = jax.block_until_ready(eznet_forward(x, w1, b1, w2, b2))

    # Pure-JAX reference of the same math (bf16 MXU operands, f32 accumulation,
    # fc1 collapsed to the exact difference-logit form of 2-class log_softmax).
    xf = jnp.pad(x.reshape(2, -1), ((0, 0), (0, K_PAD - K_RAW))).astype(jnp.bfloat16)
    w1f = jnp.pad(w1.reshape(HIDDEN, -1).T,
                  ((0, K_PAD - K_RAW), (0, 0))).astype(jnp.bfloat16)
    h = jnp.maximum(jnp.dot(xf, w1f, preferred_element_type=jnp.float32) + b1, 0.0)
    w2d_ref = (w2[1] - w2[0]).astype(jnp.bfloat16)
    d = jnp.dot(h.astype(jnp.bfloat16), w2d_ref.reshape(HIDDEN, 1),
                preferred_element_type=jnp.float32) + (b2[1] - b2[0])
    sp = jnp.maximum(d, 0.0) + jnp.log(1.0 + jnp.exp(-jnp.abs(d)))
    ref = jnp.concatenate([-sp, d - sp], axis=1)

    assert out.shape == (2, 2)
    assert jnp.allclose(out, ref, atol=1e-4, rtol=1e-4), (out, ref)

    print("KERNEL_OK")
</pallas_src>

<mosaic_0001>
module attributes {stable_mosaic.version = 11 : i64} {
  func.func @eznet_kernel(%arg0: i32, %arg1: memref<8x768xbf16, #tpu.memory_space<vmem>>, %arg2: memref<768x1024xbf16, #tpu.memory_space<vmem>>, %arg3: memref<1x1024xf32, #tpu.memory_space<vmem>>, %arg4: memref<1024x128xbf16, #tpu.memory_space<vmem>>, %arg5: memref<1x1xf32, #tpu.memory_space<vmem>>, %arg6: memref<8x2xf32, #tpu.memory_space<vmem>>) attributes {dimension_semantics = [#tpu.dimension_semantics<parallel>], iteration_bounds = array<i64: 1>, scalar_prefetch = 0 : i64, scratch_operands = 0 : i64, tpu.core_type = #tpu.core_type<tc>, window_params = [{transform_indices = @transform_0, window_bounds = array<i64: 8, 768>}, {pipeline_mode = #tpu.pipeline_mode<synchronous>, transform_indices = @transform_1, window_bounds = array<i64: 768, 1024>}, {pipeline_mode = #tpu.pipeline_mode<synchronous>, transform_indices = @transform_2, window_bounds = array<i64: 1, 1024>}, {pipeline_mode = #tpu.pipeline_mode<synchronous>, transform_indices = @transform_3, window_bounds = array<i64: 1024, 128>}, {pipeline_mode = #tpu.pipeline_mode<synchronous>, transform_indices = @transform_4, window_bounds = array<i64: 1, 1>}, {transform_indices = @transform_5, window_bounds = array<i64: 8, 2>}]} {
    %c0 = arith.constant 0 : index
    %c0_0 = arith.constant 0 : index
    %0 = vector.load %arg1[%c0, %c0_0] : memref<8x768xbf16, #tpu.memory_space<vmem>>, vector<8x768xbf16>
    %c0_1 = arith.constant 0 : index
    %c0_2 = arith.constant 0 : index
    %1 = vector.load %arg2[%c0_1, %c0_2] : memref<768x1024xbf16, #tpu.memory_space<vmem>>, vector<768x1024xbf16>
    %cst = arith.constant dense<0.000000e+00> : vector<8x1024xf32>
    %2 = tpu.matmul %0, %1, %cst {dimension_numbers = #tpu.dot_dimension_numbers<[1], [0], [0], [1], [0, 0, 1, 1], [], []>} : vector<8x768xbf16>, vector<768x1024xbf16>, vector<8x1024xf32> -> vector<8x1024xf32>
    %c0_3 = arith.constant 0 : index
    %c0_4 = arith.constant 0 : index
    %3 = vector.load %arg3[%c0_3, %c0_4] : memref<1x1024xf32, #tpu.memory_space<vmem>>, vector<1x1024xf32>
    %4 = vector.broadcast %3 : vector<1x1024xf32> to vector<8x1024xf32>
    %5 = arith.addf %2, %4 : vector<8x1024xf32>
    %cst_5 = arith.constant 0.000000e+00 : f32
    %6 = vector.broadcast %cst_5 : f32 to vector<8x1024xf32>
    %7 = arith.maximumf %5, %6 : vector<8x1024xf32>
    %8 = arith.truncf %7 : vector<8x1024xf32> to vector<8x1024xbf16>
    %c0_6 = arith.constant 0 : index
    %c0_7 = arith.constant 0 : index
    %9 = vector.load %arg4[%c0_6, %c0_7] : memref<1024x128xbf16, #tpu.memory_space<vmem>>, vector<1024x128xbf16>
    %cst_8 = arith.constant dense<0.000000e+00> : vector<8x128xf32>
    %10 = tpu.matmul %8, %9, %cst_8 {dimension_numbers = #tpu.dot_dimension_numbers<[1], [0], [0], [1], [0, 0, 1, 1], [], []>} : vector<8x1024xbf16>, vector<1024x128xbf16>, vector<8x128xf32> -> vector<8x128xf32>
    %11 = vector.extract_strided_slice %10 {offsets = [0, 0], sizes = [8, 1], strides = [1, 1]} : vector<8x128xf32> to vector<8x1xf32>
    %c0_9 = arith.constant 0 : index
    %c0_10 = arith.constant 0 : index
    %12 = vector.load %arg5[%c0_9, %c0_10] : memref<1x1xf32, #tpu.memory_space<vmem>>, vector<1x1xf32>
    %13 = vector.broadcast %12 : vector<1x1xf32> to vector<8x1xf32>
    %14 = arith.addf %11, %13 : vector<8x1xf32>
    %cst_11 = arith.constant 0.000000e+00 : f32
    %15 = vector.broadcast %cst_11 : f32 to vector<8x1xf32>
    %16 = arith.maximumf %14, %15 : vector<8x1xf32>
    %17 = math.absf %14 : vector<8x1xf32>
    %cst_12 = arith.constant 0.000000e+00 : f32
    %18 = vector.broadcast %cst_12 : f32 to vector<8x1xf32>
    %19 = arith.subf %18, %17 : vector<8x1xf32>
    %20 = math.exp %19 : vector<8x1xf32>
    %cst_13 = arith.constant 1.000000e+00 : f32
    %21 = vector.broadcast %cst_13 : f32 to vector<8x1xf32>
    %22 = arith.addf %21, %20 : vector<8x1xf32>
    %23 = math.log %22 : vector<8x1xf32>
    %24 = arith.addf %16, %23 : vector<8x1xf32>
    %cst_14 = arith.constant 0.000000e+00 : f32
    %25 = vector.broadcast %cst_14 : f32 to vector<8x1xf32>
    %26 = arith.subf %25, %24 : vector<8x1xf32>
    %c0_15 = arith.constant 0 : index
    %c0_16 = arith.constant 0 : index
    %27 = vector.load %arg6[%c0_15, %c0_16] : memref<8x2xf32, #tpu.memory_space<vmem>>, vector<8x1xf32>
    tpu.vector_store %arg6[%c0_15, %c0_16], %26 {strides = array<i32>} : memref<8x2xf32, #tpu.memory_space<vmem>>, vector<8x1xf32>,
    %28 = arith.subf %14, %24 : vector<8x1xf32>
    %c0_17 = arith.constant 0 : index
    %c1 = arith.constant 1 : index
    %29 = vector.load %arg6[%c0_17, %c1] : memref<8x2xf32, #tpu.memory_space<vmem>>, vector<8x1xf32>
    tpu.vector_store %arg6[%c0_17, %c1], %28 {strides = array<i32>} : memref<8x2xf32, #tpu.memory_space<vmem>>, vector<8x1xf32>,
    return
  }
  func.func @transform_0(%arg0: i32) -> (i32, i32) {
    %c0_i32 = arith.constant 0 : i32
    %c0_i32_0 = arith.constant 0 : i32
    return %arg0, %c0_i32 : i32, i32
  }
  func.func @transform_1(%arg0: i32) -> (i32, i32) {
    %c0_i32 = arith.constant 0 : i32
    %c0_i32_0 = arith.constant 0 : i32
    %c0_i32_1 = arith.constant 0 : i32
    return %c0_i32, %c0_i32_0 : i32, i32
  }
  func.func @transform_2(%arg0: i32) -> (i32, i32) {
    %c0_i32 = arith.constant 0 : i32
    %c0_i32_0 = arith.constant 0 : i32
    %c0_i32_1 = arith.constant 0 : i32
    return %c0_i32, %c0_i32_0 : i32, i32
  }
  func.func @transform_3(%arg0: i32) -> (i32, i32) {
    %c0_i32 = arith.constant 0 : i32
    %c0_i32_0 = arith.constant 0 : i32
    %c0_i32_1 = arith.constant 0 : i32
    return %c0_i32, %c0_i32_0 : i32, i32
  }
  func.func @transform_4(%arg0: i32) -> (i32, i32) {
    %c0_i32 = arith.constant 0 : i32
    %c0_i32_0 = arith.constant 0 : i32
    %c0_i32_1 = arith.constant 0 : i32
    return %c0_i32, %c0_i32_0 : i32, i32
  }
  func.func @transform_5(%arg0: i32) -> (i32, i32) {
    %c0_i32 = arith.constant 0 : i32
    %c0_i32_0 = arith.constant 0 : i32
    return %arg0, %c0_i32 : i32, i32
  }
}

</mosaic_0001>

<llo_original>
// kernel: tpu_custom_call.1
$region0: #{tpu_custom_call.1}
  #allocation0 [shape = 'u32[]', space=smem, size = 0x4, offset = 0x4, fixed_abs, tag = 'smem constant byte address 0x4 - core index']
  #allocation1 [shape = 'u32[144,128]{1,0:T(1,128)}', space=vmem, size = 0x12000, scoped, tag = 'internal scratch']
  #allocation2 [shape = 'f32[1,1]{1,0:T(1,128)S(1)}', space=vmem, size = 0x200, scoped, tag = 'scoped memory for tpu_custom_call.1']
  %s0 = inlined_call_operand.hbm [shape: bf16[8,768], index: 0, kind: input, shape index: {}]
  %s1 = inlined_call_operand.hbm [shape: bf16[768,1024], index: 1, kind: input, shape index: {}]
  %s2 = inlined_call_operand.hbm [shape: f32[1,1024], index: 2, kind: input, shape index: {}]
  %s3 = inlined_call_operand.hbm [shape: bf16[1024,128], index: 3, kind: input, shape index: {}]
  %s4 = inlined_call_operand.<no memory space> [shape: f32[1,1], index: 4, kind: input, shape index: {}]
  %s5 = inlined_call_operand.vmem [shape: f32[8,2], index: 5, kind: output, shape index: {}]
  %s6 = sld [smem:[#allocation0]]
  $region46: #{tpu_custom_call.1} parent=0
    _
  %s8 = ssub.s32 1, %s6
  %s9 = scalar_select 0, %s8, %s6
  %v10 = vstv %s4
  %11 = vst [vmem:[#allocation2] sm:$0x1] %v10
  $region1: #{tpu_custom_call.1} parent=0
    #allocation3 [shape = 'u8[12288]{0}', space=vmem, size = 0x3000, scoped, tag = 'input window, operand 0, single buffered']
    #allocation4 [shape = 's32[1]{0}', space=sflag, size = 0x4, scoped, tag = 'scoped memory for tpu_custom_call.1']
    #allocation5 [shape = 'u8[1572864]{0}', space=vmem, size = 0x180000, scoped, tag = 'input window, operand 1, single buffered']
    #allocation6 [shape = 's32[1]{0}', space=sflag, size = 0x4, scoped, tag = 'scoped memory for tpu_custom_call.1']
    #allocation7 [shape = 'u8[4096]{0}', space=vmem, size = 0x1000, scoped, tag = 'input window, operand 2, single buffered']
    #allocation8 [shape = 'u8[262144]{0}', space=vmem, size = 0x40000, scoped, tag = 'input window, operand 3, single buffered']
    #allocation9 [shape = 's32[1]{0}', space=sflag, size = 0x4, scoped, tag = 'scoped memory for tpu_custom_call.1']
    %12 = vsyncpa [#allocation4], 0
    %13 = vsyncpa [#allocation6], 0
    %14 = vsyncpa [#allocation9], 0
    // Predicated region
    $region2: #{tpu_custom_call.1} parent=1 // pred_check
      _
    $region3: #{tpu_custom_call.1} parent=1 // pred_check_branch
      %16 = sbr.rel (0) target = $region5
    $region4: #{tpu_custom_call.1} parent=1 // pred_region
      %s18 = ssub.s32 384, 384
      %19 = vsyncadd [#allocation4], %s18
      %s21 = sshll.u32 [#allocation3], 4
      %s22 = int_to_ptr.vmem [resolvable:$true] %s21
      %24 = dma.hbm_to_vmem [thread:$0]  %s0, 384, %s22, [#allocation4]
    $region5: #{tpu_custom_call.1} parent=1 // pred_fallthru
      _
    // Predicated region
    $region6: #{tpu_custom_call.1} parent=1 // pred_check
      _
    $region7: #{tpu_custom_call.1} parent=1 // pred_check_branch
      %26 = sbr.rel (0) target = $region9
    $region8: #{tpu_custom_call.1} parent=1 // pred_region
      %s28 = ssub.s32 49152, 49152
      %29 = vsyncadd [#allocation6], %s28
      %s30 = sshll.u32 [#allocation5], 4
      %s31 = int_to_ptr.vmem [resolvable:$true] %s30
      %36 = dma.hbm_to_vmem [thread:$0]  %s1, 49152, %s31, [#allocation6], 512, 512, 32
    $region9: #{tpu_custom_call.1} parent=1 // pred_fallthru
      _
    // Predicated region
    $region10: #{tpu_custom_call.1} parent=1 // pred_check
      _
    $region11: #{tpu_custom_call.1} parent=1 // pred_check_branch
      %38 = sbr.rel (0) target = $region13
    $region12: #{tpu_custom_call.1} parent=1 // pred_region
      %s40 = ssub.s32 128, 128
      %41 = vsyncadd [#allocation6], %s40
      %s43 = sshll.u32 [#allocation7], 4
      %s44 = int_to_ptr.vmem [resolvable:$true] %s43
      %46 = dma.hbm_to_vmem [thread:$0]  %s2, 128, %s44, [#allocation6]
    $region13: #{tpu_custom_call.1} parent=1 // pred_fallthru
      _
    // Predicated region
    $region14: #{tpu_custom_call.1} parent=1 // pred_check
      _
    $region15: #{tpu_custom_call.1} parent=1 // pred_check_branch
      %48 = sbr.rel (0) target = $region17
    $region16: #{tpu_custom_call.1} parent=1 // pred_region
      %s50 = ssub.s32 8192, 8192
      %51 = vsyncadd [#allocation9], %s50
      %s52 = sshll.u32 [#allocation8], 4
      %s53 = int_to_ptr.vmem [resolvable:$true] %s52
      %58 = dma.hbm_to_vmem [thread:$0]  %s3, 8192, %s53, [#allocation9], 64, 64, 4
    $region17: #{tpu_custom_call.1} parent=1 // pred_fallthru
      _
    // Predicated region
    $region18: #{tpu_custom_call.1} parent=1 // pred_check
      _
    $region19: #{tpu_custom_call.1} parent=1 // pred_check_branch
      %60 = sbr.rel (0) target = $region21
    $region20: #{tpu_custom_call.1} parent=1 // pred_region
      _
    $region21: #{tpu_custom_call.1} parent=1 // pred_fallthru
      _
    // Predicated region
    $region22: #{tpu_custom_call.1} parent=1 // pred_check
      _
    $region23: #{tpu_custom_call.1} parent=1 // pred_check_branch
      %62 = sbr.rel (0) target = $region25
    $region24: #{tpu_custom_call.1} parent=1 // pred_region
      %63 = dma.done [#allocation4], 384
    $region25: #{tpu_custom_call.1} parent=1 // pred_fallthru
      _
    // Predicated region
    $region26: #{tpu_custom_call.1} parent=1 // pred_check
      _
    $region27: #{tpu_custom_call.1} parent=1 // pred_check_branch
      %65 = sbr.rel (0) target = $region29
    $region28: #{tpu_custom_call.1} parent=1 // pred_region
      %66 = dma.done [#allocation6], 49152
    $region29: #{tpu_custom_call.1} parent=1 // pred_fallthru
      _
    // Predicated region
    $region30: #{tpu_custom_call.1} parent=1 // pred_check
      _
    $region31: #{tpu_custom_call.1} parent=1 // pred_check_branch
      %68 = sbr.rel (0) target = $region33
    $region32: #{tpu_custom_call.1} parent=1 // pred_region
      %69 = dma.done [#allocation6], 128
    $region33: #{tpu_custom_call.1} parent=1 // pred_fallthru
      _
    // Predicated region
    $region34: #{tpu_custom_call.1} parent=1 // pred_check
      _
    $region35: #{tpu_custom_call.1} parent=1 // pred_check_branch
      %71 = sbr.rel (0) target = $region37
    $region36: #{tpu_custom_call.1} parent=1 // pred_region
      %72 = dma.done [#allocation9], 8192
    $region37: #{tpu_custom_call.1} parent=1 // pred_fallthru
      _
    %v74 = vld [vmem:[#allocation3] sm:$0xff]
    %v75 = vld [vmem:[#allocation3 + $0x8] sm:$0xff]
    %v76 = vld [vmem:[#allocation3 + $0x10] sm:$0xff]
    %v77 = vld [vmem:[#allocation5] sm:$0xff]
    %v78 = vld [vmem:[#allocation5 + $0x8] sm:$0xff]
    %v79 = vld [vmem:[#allocation5 + $0x10] sm:$0xff]
    %v80 = vld [vmem:[#allocation5 + $0x18] sm:$0xff]
    %v81 = vld [vmem:[#allocation5 + $0x20] sm:$0xff]
    %v82 = vld [vmem:[#allocation5 + $0x28] sm:$0xff]
    %v83 = vld [vmem:[#allocation5 + $0x30] sm:$0xff]
    %v84 = vld [vmem:[#allocation5 + $0x38] sm:$0xff]
    %v85 = vld [vmem:[#allocation5 + $0x40] sm:$0xff]
    %v86 = vld [vmem:[#allocation5 + $0x48] sm:$0xff]
    %v87 = vld [vmem:[#allocation5 + $0x50] sm:$0xff]
    %v88 = vld [vmem:[#allocation5 + $0x58] sm:$0xff]
    %v89 = vld [vmem:[#allocation5 + $0x60] sm:$0xff]
    %v90 = vld [vmem:[#allocation5 + $0x68] sm:$0xff]
    %v91 = vld [vmem:[#allocation5 + $0x70] sm:$0xff]
    %v92 = vld [vmem:[#allocation5 + $0x78] sm:$0xff]
    %v93 = vld [vmem:[#allocation5 + $0x80] sm:$0xff]
    %v94 = vld [vmem:[#allocation5 + $0x88] sm:$0xff]
    %v95 = vld [vmem:[#allocation5 + $0x90] sm:$0xff]
    %v96 = vld [vmem:[#allocation5 + $0x98] sm:$0xff]
    %v97 = vld [vmem:[#allocation5 + $0xa0] sm:$0xff]
    %v98 = vld [vmem:[#allocation5 + $0xa8] sm:$0xff]
    %v99 = vld [vmem:[#allocation5 + $0xb0] sm:$0xff]
    %v100 = vld [vmem:[#allocation5 + $0xb8] sm:$0xff]
    %v101 = vld [vmem:[#allocation5 + $0xc0] sm:$0xff]
    %v102 = vld [vmem:[#allocation5 + $0xc8] sm:$0xff]
    %v103 = vld [vmem:[#allocation5 + $0xd0] sm:$0xff]
    %v104 = vld [vmem:[#allocation5 + $0xd8] sm:$0xff]
    %v105 = vld [vmem:[#allocation5 + $0xe0] sm:$0xff]
    %v106 = vld [vmem:[#allocation5 + $0xe8] sm:$0xff]
    %v107 = vld [vmem:[#allocation5 + $0xf0] sm:$0xff]
    %v108 = vld [vmem:[#allocation5 + $0xf8] sm:$0xff]
    %v109 = vld [vmem:[#allocation5 + $0x100] sm:$0xff]
    %v110 = vld [vmem:[#allocation5 + $0x108] sm:$0xff]
    %v111 = vld [vmem:[#allocation5 + $0x110] sm:$0xff]
    %v112 = vld [vmem:[#allocation5 + $0x118] sm:$0xff]
    %v113 = vld [vmem:[#allocation5 + $0x120] sm:$0xff]
    %v114 = vld [vmem:[#allocation5 + $0x128] sm:$0xff]
    %v115 = vld [vmem:[#allocation5 + $0x130] sm:$0xff]
    %v116 = vld [vmem:[#allocation5 + $0x138] sm:$0xff]
    %v117 = vld [vmem:[#allocation5 + $0x140] sm:$0xff]
    %v118 = vld [vmem:[#allocation5 + $0x148] sm:$0xff]
    %v119 = vld [vmem:[#allocation5 + $0x150] sm:$0xff]
    %v120 = vld [vmem:[#allocation5 + $0x158] sm:$0xff]
    %v121 = vld [vmem:[#allocation5 + $0x160] sm:$0xff]
    %v122 = vld [vmem:[#allocation5 + $0x168] sm:$0xff]
    %v123 = vld [vmem:[#allocation5 + $0x170] sm:$0xff]
    %v124 = vld [vmem:[#allocation5 + $0x178] sm:$0xff]
    %v125 = vld [vmem:[#allocation5 + $0x180] sm:$0xff]
    %v126 = vld [vmem:[#allocation5 + $0x188] sm:$0xff]
    %v127 = vld [vmem:[#allocation5 + $0x190] sm:$0xff]
    %v128 = vld [vmem:[#allocation5 + $0x198] sm:$0xff]
    %v129 = vld [vmem:[#allocation5 + $0x1a0] sm:$0xff]
    %v130 = vld [vmem:[#allocation5 + $0x1a8] sm:$0xff]
    %v131 = vld [vmem:[#allocation5 + $0x1b0] sm:$0xff]
    %v132 = vld [vmem:[#allocation5 + $0x1b8] sm:$0xff]
    %v133 = vld [vmem:[#allocation5 + $0x1c0] sm:$0xff]
    %v134 = vld [vmem:[#allocation5 + $0x1c8] sm:$0xff]
    %v135 = vld [vmem:[#allocation5 + $0x1d0] sm:$0xff]
    %v136 = vld [vmem:[#allocation5 + $0x1d8] sm:$0xff]
    %v137 = vld [vmem:[#allocation5 + $0x1e0] sm:$0xff]
    %v138 = vld [vmem:[#allocation5 + $0x1e8] sm:$0xff]
    %v139 = vld [vmem:[#allocation5 + $0x1f0] sm:$0xff]
    %v140 = vld [vmem:[#allocation5 + $0x1f8] sm:$0xff]
    %v141 = vld [vmem:[#allocation5 + $0x200] sm:$0xff]
    %v142 = vld [vmem:[#allocation5 + $0x208] sm:$0xff]
    %v143 = vld [vmem:[#allocation5 + $0x210] sm:$0xff]
    %v144 = vld [vmem:[#allocation5 + $0x218] sm:$0xff]
    %v145 = vld [vmem:[#allocation5 + $0x220] sm:$0xff]
    %v146 = vld [vmem:[#allocation5 + $0x228] sm:$0xff]
    %v147 = vld [vmem:[#allocation5 + $0x230] sm:$0xff]
    %v148 = vld [vmem:[#allocation5 + $0x238] sm:$0xff]
    %v149 = vld [vmem:[#allocation5 + $0x240] sm:$0xff]
    %v150 = vld [vmem:[#allocation5 + $0x248] sm:$0xff]
    %v151 = vld [vmem:[#allocation5 + $0x250] sm:$0xff]
    %v152 = vld [vmem:[#allocation5 + $0x258] sm:$0xff]
    %v153 = vld [vmem:[#allocation5 + $0x260] sm:$0xff]
    %v154 = vld [vmem:[#allocation5 + $0x268] sm:$0xff]
    %v155 = vld [vmem:[#allocation5 + $0x270] sm:$0xff]
    %v156 = vld [vmem:[#allocation5 + $0x278] sm:$0xff]
    %v157 = vld [vmem:[#allocation5 + $0x280] sm:$0xff]
    %v158 = vld [vmem:[#allocation5 + $0x288] sm:$0xff]
    %v159 = vld [vmem:[#allocation5 + $0x290] sm:$0xff]
    %v160 = vld [vmem:[#allocation5 + $0x298] sm:$0xff]
    %v161 = vld [vmem:[#allocation5 + $0x2a0] sm:$0xff]
    %v162 = vld [vmem:[#allocation5 + $0x2a8] sm:$0xff]
    %v163 = vld [vmem:[#allocation5 + $0x2b0] sm:$0xff]
    %v164 = vld [vmem:[#allocation5 + $0x2b8] sm:$0xff]
    %v165 = vld [vmem:[#allocation5 + $0x2c0] sm:$0xff]
    %v166 = vld [vmem:[#allocation5 + $0x2c8] sm:$0xff]
    %v167 = vld [vmem:[#allocation5 + $0x2d0] sm:$0xff]
    %v168 = vld [vmem:[#allocation5 + $0x2d8] sm:$0xff]
    %v169 = vld [vmem:[#allocation5 + $0x2e0] sm:$0xff]
    %v170 = vld [vmem:[#allocation5 + $0x2e8] sm:$0xff]
    %v171 = vld [vmem:[#allocation5 + $0x2f0] sm:$0xff]
    %v172 = vld [vmem:[#allocation5 + $0x2f8] sm:$0xff]
    %v173 = vld [vmem:[#allocation5 + $0x300] sm:$0xff]
    %v174 = vld [vmem:[#allocation5 + $0x308] sm:$0xff]
    %v175 = vld [vmem:[#allocation5 + $0x310] sm:$0xff]
    %v176 = vld [vmem:[#allocation5 + $0x318] sm:$0xff]
    %v177 = vld [vmem:[#allocation5 + $0x320] sm:$0xff]
    %v178 = vld [vmem:[#allocation5 + $0x328] sm:$0xff]
    %v179 = vld [vmem:[#allocation5 + $0x330] sm:$0xff]
    %v180 = vld [vmem:[#allocation5 + $0x338] sm:$0xff]
    %v181 = vld [vmem:[#allocation5 + $0x340] sm:$0xff]
    %v182 = vld [vmem:[#allocation5 + $0x348] sm:$0xff]
    %v183 = vld [vmem:[#allocation5 + $0x350] sm:$0xff]
    %v184 = vld [vmem:[#allocation5 + $0x358] sm:$0xff]
    %v185 = vld [vmem:[#allocation5 + $0x360] sm:$0xff]
    %v186 = vld [vmem:[#allocation5 + $0x368] sm:$0xff]
    %v187 = vld [vmem:[#allocation5 + $0x370] sm:$0xff]
    %v188 = vld [vmem:[#allocation5 + $0x378] sm:$0xff]
    %v189 = vld [vmem:[#allocation5 + $0x380] sm:$0xff]
    %v190 = vld [vmem:[#allocation5 + $0x388] sm:$0xff]
    %v191 = vld [vmem:[#allocation5 + $0x390] sm:$0xff]
    %v192 = vld [vmem:[#allocation5 + $0x398] sm:$0xff]
    %v193 = vld [vmem:[#allocation5 + $0x3a0] sm:$0xff]
    %v194 = vld [vmem:[#allocation5 + $0x3a8] sm:$0xff]
    %v195 = vld [vmem:[#allocation5 + $0x3b0] sm:$0xff]
    %v196 = vld [vmem:[#allocation5 + $0x3b8] sm:$0xff]
    %v197 = vld [vmem:[#allocation5 + $0x3c0] sm:$0xff]
    %v198 = vld [vmem:[#allocation5 + $0x3c8] sm:$0xff]
    %v199 = vld [vmem:[#allocation5 + $0x3d0] sm:$0xff]
    %v200 = vld [vmem:[#allocation5 + $0x3d8] sm:$0xff]
    %v201 = vld [vmem:[#allocation5 + $0x3e0] sm:$0xff]
    %v202 = vld [vmem:[#allocation5 + $0x3e8] sm:$0xff]
    %v203 = vld [vmem:[#allocation5 + $0x3f0] sm:$0xff]
    %v204 = vld [vmem:[#allocation5 + $0x3f8] sm:$0xff]
    %v205 = vld [vmem:[#allocation5 + $0x400] sm:$0xff]
    %v206 = vld [vmem:[#allocation5 + $0x408] sm:$0xff]
    %v207 = vld [vmem:[#allocation5 + $0x410] sm:$0xff]
    %v208 = vld [vmem:[#allocation5 + $0x418] sm:$0xff]
    %v209 = vld [vmem:[#allocation5 + $0x420] sm:$0xff]
    %v210 = vld [vmem:[#allocation5 + $0x428] sm:$0xff]
    %v211 = vld [vmem:[#allocation5 + $0x430] sm:$0xff]
    %v212 = vld [vmem:[#allocation5 + $0x438] sm:$0xff]
    %v213 = vld [vmem:[#allocation5 + $0x440] sm:$0xff]
    %v214 = vld [vmem:[#allocation5 + $0x448] sm:$0xff]
    %v215 = vld [vmem:[#allocation5 + $0x450] sm:$0xff]
    %v216 = vld [vmem:[#allocation5 + $0x458] sm:$0xff]
    %v217 = vld [vmem:[#allocation5 + $0x460] sm:$0xff]
    %v218 = vld [vmem:[#allocation5 + $0x468] sm:$0xff]
    %v219 = vld [vmem:[#allocation5 + $0x470] sm:$0xff]
    %v220 = vld [vmem:[#allocation5 + $0x478] sm:$0xff]
    %v221 = vld [vmem:[#allocation5 + $0x480] sm:$0xff]
    %v222 = vld [vmem:[#allocation5 + $0x488] sm:$0xff]
    %v223 = vld [vmem:[#allocation5 + $0x490] sm:$0xff]
    %v224 = vld [vmem:[#allocation5 + $0x498] sm:$0xff]
    %v225 = vld [vmem:[#allocation5 + $0x4a0] sm:$0xff]
    %v226 = vld [vmem:[#allocation5 + $0x4a8] sm:$0xff]
    %v227 = vld [vmem:[#allocation5 + $0x4b0] sm:$0xff]
    %v228 = vld [vmem:[#allocation5 + $0x4b8] sm:$0xff]
    %v229 = vld [vmem:[#allocation5 + $0x4c0] sm:$0xff]
    %v230 = vld [vmem:[#allocation5 + $0x4c8] sm:$0xff]
    %v231 = vld [vmem:[#allocation5 + $0x4d0] sm:$0xff]
    %v232 = vld [vmem:[#allocation5 + $0x4d8] sm:$0xff]
    %v233 = vld [vmem:[#allocation5 + $0x4e0] sm:$0xff]
    %v234 = vld [vmem:[#allocation5 + $0x4e8] sm:$0xff]
    %v235 = vld [vmem:[#allocation5 + $0x4f0] sm:$0xff]
    %v236 = vld [vmem:[#allocation5 + $0x4f8] sm:$0xff]
    %v237 = vld [vmem:[#allocation5 + $0x500] sm:$0xff]
    %v238 = vld [vmem:[#allocation5 + $0x508] sm:$0xff]
    %v239 = vld [vmem:[#allocation5 + $0x510] sm:$0xff]
    %v240 = vld [vmem:[#allocation5 + $0x518] sm:$0xff]
    %v241 = vld [vmem:[#allocation5 + $0x520] sm:$0xff]
    %v242 = vld [vmem:[#allocation5 + $0x528] sm:$0xff]
    %v243 = vld [vmem:[#allocation5 + $0x530] sm:$0xff]
    %v244 = vld [vmem:[#allocation5 + $0x538] sm:$0xff]
    %v245 = vld [vmem:[#allocation5 + $0x540] sm:$0xff]
    %v246 = vld [vmem:[#allocation5 + $0x548] sm:$0xff]
    %v247 = vld [vmem:[#allocation5 + $0x550] sm:$0xff]
    %v248 = vld [vmem:[#allocation5 + $0x558] sm:$0xff]
    %v249 = vld [vmem:[#allocation5 + $0x560] sm:$0xff]
    %v250 = vld [vmem:[#allocation5 + $0x568] sm:$0xff]
    %v251 = vld [vmem:[#allocation5 + $0x570] sm:$0xff]
    %v252 = vld [vmem:[#allocation5 + $0x578] sm:$0xff]
    %v253 = vld [vmem:[#allocation5 + $0x580] sm:$0xff]
    %v254 = vld [vmem:[#allocation5 + $0x588] sm:$0xff]
    %v255 = vld [vmem:[#allocation5 + $0x590] sm:$0xff]
    %v256 = vld [vmem:[#allocation5 + $0x598] sm:$0xff]
    %v257 = vld [vmem:[#allocation5 + $0x5a0] sm:$0xff]
    %v258 = vld [vmem:[#allocation5 + $0x5a8] sm:$0xff]
    %v259 = vld [vmem:[#allocation5 + $0x5b0] sm:$0xff]
    %v260 = vld [vmem:[#allocation5 + $0x5b8] sm:$0xff]
    %v261 = vld [vmem:[#allocation5 + $0x5c0] sm:$0xff]
    %v262 = vld [vmem:[#allocation5 + $0x5c8] sm:$0xff]
    %v263 = vld [vmem:[#allocation5 + $0x5d0] sm:$0xff]
    %v264 = vld [vmem:[#allocation5 + $0x5d8] sm:$0xff]
    %v265 = vld [vmem:[#allocation5 + $0x5e0] sm:$0xff]
    %v266 = vld [vmem:[#allocation5 + $0x5e8] sm:$0xff]
    %v267 = vld [vmem:[#allocation5 + $0x5f0] sm:$0xff]
    %v268 = vld [vmem:[#allocation5 + $0x5f8] sm:$0xff]
    %v269 = vld [vmem:[#allocation5 + $0x600] sm:$0xff]
    %v270 = vld [vmem:[#allocation5 + $0x608] sm:$0xff]
    %v271 = vld [vmem:[#allocation5 + $0x610] sm:$0xff]
    %v272 = vld [vmem:[#allocation5 + $0x618] sm:$0xff]
    %v273 = vld [vmem:[#allocation5 + $0x620] sm:$0xff]
    %v274 = vld [vmem:[#allocation5 + $0x628] sm:$0xff]
    %v275 = vld [vmem:[#allocation5 + $0x630] sm:$0xff]
    %v276 = vld [vmem:[#allocation5 + $0x638] sm:$0xff]
    %v277 = vld [vmem:[#allocation5 + $0x640] sm:$0xff]
    %v278 = vld [vmem:[#allocation5 + $0x648] sm:$0xff]
    %v279 = vld [vmem:[#allocation5 + $0x650] sm:$0xff]
    %v280 = vld [vmem:[#allocation5 + $0x658] sm:$0xff]
    %v281 = vld [vmem:[#allocation5 + $0x660] sm:$0xff]
    %v282 = vld [vmem:[#allocation5 + $0x668] sm:$0xff]
    %v283 = vld [vmem:[#allocation5 + $0x670] sm:$0xff]
    %v284 = vld [vmem:[#allocation5 + $0x678] sm:$0xff]
    %v285 = vld [vmem:[#allocation5 + $0x680] sm:$0xff]
    %v286 = vld [vmem:[#allocation5 + $0x688] sm:$0xff]
    %v287 = vld [vmem:[#allocation5 + $0x690] sm:$0xff]
    %v288 = vld [vmem:[#allocation5 + $0x698] sm:$0xff]
    %v289 = vld [vmem:[#allocation5 + $0x6a0] sm:$0xff]
    %v290 = vld [vmem:[#allocation5 + $0x6a8] sm:$0xff]
    %v291 = vld [vmem:[#allocation5 + $0x6b0] sm:$0xff]
    %v292 = vld [vmem:[#allocation5 + $0x6b8] sm:$0xff]
    %v293 = vld [vmem:[#allocation5 + $0x6c0] sm:$0xff]
    %v294 = vld [vmem:[#allocation5 + $0x6c8] sm:$0xff]
    %v295 = vld [vmem:[#allocation5 + $0x6d0] sm:$0xff]
    %v296 = vld [vmem:[#allocation5 + $0x6d8] sm:$0xff]
    %v297 = vld [vmem:[#allocation5 + $0x6e0] sm:$0xff]
    %v298 = vld [vmem:[#allocation5 + $0x6e8] sm:$0xff]
    %v299 = vld [vmem:[#allocation5 + $0x6f0] sm:$0xff]
    %v300 = vld [vmem:[#allocation5 + $0x6f8] sm:$0xff]
    %v301 = vld [vmem:[#allocation5 + $0x700] sm:$0xff]
    %v302 = vld [vmem:[#allocation5 + $0x708] sm:$0xff]
    %v303 = vld [vmem:[#allocation5 + $0x710] sm:$0xff]
    %v304 = vld [vmem:[#allocation5 + $0x718] sm:$0xff]
    %v305 = vld [vmem:[#allocation5 + $0x720] sm:$0xff]
    %v306 = vld [vmem:[#allocation5 + $0x728] sm:$0xff]
    %v307 = vld [vmem:[#allocation5 + $0x730] sm:$0xff]
    %v308 = vld [vmem:[#allocation5 + $0x738] sm:$0xff]
    %v309 = vld [vmem:[#allocation5 + $0x740] sm:$0xff]
    %v310 = vld [vmem:[#allocation5 + $0x748] sm:$0xff]
    %v311 = vld [vmem:[#allocation5 + $0x750] sm:$0xff]
    %v312 = vld [vmem:[#allocation5 + $0x758] sm:$0xff]
    %v313 = vld [vmem:[#allocation5 + $0x760] sm:$0xff]
    %v314 = vld [vmem:[#allocation5 + $0x768] sm:$0xff]
    %v315 = vld [vmem:[#allocation5 + $0x770] sm:$0xff]
    %v316 = vld [vmem:[#allocation5 + $0x778] sm:$0xff]
    %v317 = vld [vmem:[#allocation5 + $0x780] sm:$0xff]
    %v318 = vld [vmem:[#allocation5 + $0x788] sm:$0xff]
    %v319 = vld [vmem:[#allocation5 + $0x790] sm:$0xff]
    %v320 = vld [vmem:[#allocation5 + $0x798] sm:$0xff]
    %v321 = vld [vmem:[#allocation5 + $0x7a0] sm:$0xff]
    %v322 = vld [vmem:[#allocation5 + $0x7a8] sm:$0xff]
    %v323 = vld [vmem:[#allocation5 + $0x7b0] sm:$0xff]
    %v324 = vld [vmem:[#allocation5 + $0x7b8] sm:$0xff]
    %v325 = vld [vmem:[#allocation5 + $0x7c0] sm:$0xff]
    %v326 = vld [vmem:[#allocation5 + $0x7c8] sm:$0xff]
    %v327 = vld [vmem:[#allocation5 + $0x7d0] sm:$0xff]
    %v328 = vld [vmem:[#allocation5 + $0x7d8] sm:$0xff]
    %v329 = vld [vmem:[#allocation5 + $0x7e0] sm:$0xff]
    %v330 = vld [vmem:[#allocation5 + $0x7e8] sm:$0xff]
    %v331 = vld [vmem:[#allocation5 + $0x7f0] sm:$0xff]
    %v332 = vld [vmem:[#allocation5 + $0x7f8] sm:$0xff]
    %v333 = vld [vmem:[#allocation5 + $0x800] sm:$0xff]
    %v334 = vld [vmem:[#allocation5 + $0x808] sm:$0xff]
    %v335 = vld [vmem:[#allocation5 + $0x810] sm:$0xff]
    %v336 = vld [vmem:[#allocation5 + $0x818] sm:$0xff]
    %v337 = vld [vmem:[#allocation5 + $0x820] sm:$0xff]
    %v338 = vld [vmem:[#allocation5 + $0x828] sm:$0xff]
    %v339 = vld [vmem:[#allocation5 + $0x830] sm:$0xff]
    %v340 = vld [vmem:[#allocation5 + $0x838] sm:$0xff]
    %v341 = vld [vmem:[#allocation5 + $0x840] sm:$0xff]
    %v342 = vld [vmem:[#allocation5 + $0x848] sm:$0xff]
    %v343 = vld [vmem:[#allocation5 + $0x850] sm:$0xff]
    %v344 = vld [vmem:[#allocation5 + $0x858] sm:$0xff]
    %v345 = vld [vmem:[#allocation5 + $0x860] sm:$0xff]
    %v346 = vld [vmem:[#allocation5 + $0x868] sm:$0xff]
    %v347 = vld [vmem:[#allocation5 + $0x870] sm:$0xff]
    %v348 = vld [vmem:[#allocation5 + $0x878] sm:$0xff]
    %v349 = vld [vmem:[#allocation5 + $0x880] sm:$0xff]
    %v350 = vld [vmem:[#allocation5 + $0x888] sm:$0xff]
    %v351 = vld [vmem:[#allocation5 + $0x890] sm:$0xff]
    %v352 = vld [vmem:[#allocation5 + $0x898] sm:$0xff]
    %v353 = vld [vmem:[#allocation5 + $0x8a0] sm:$0xff]
    %v354 = vld [vmem:[#allocation5 + $0x8a8] sm:$0xff]
    %v355 = vld [vmem:[#allocation5 + $0x8b0] sm:$0xff]
    %v356 = vld [vmem:[#allocation5 + $0x8b8] sm:$0xff]
    %v357 = vld [vmem:[#allocation5 + $0x8c0] sm:$0xff]
    %v358 = vld [vmem:[#allocation5 + $0x8c8] sm:$0xff]
    %v359 = vld [vmem:[#allocation5 + $0x8d0] sm:$0xff]
    %v360 = vld [vmem:[#allocation5 + $0x8d8] sm:$0xff]
    %v361 = vld [vmem:[#allocation5 + $0x8e0] sm:$0xff]
    %v362 = vld [vmem:[#allocation5 + $0x8e8] sm:$0xff]
    %v363 = vld [vmem:[#allocation5 + $0x8f0] sm:$0xff]
    %v364 = vld [vmem:[#allocation5 + $0x8f8] sm:$0xff]
    %v365 = vld [vmem:[#allocation5 + $0x900] sm:$0xff]
    %v366 = vld [vmem:[#allocation5 + $0x908] sm:$0xff]
    %v367 = vld [vmem:[#allocation5 + $0x910] sm:$0xff]
    %v368 = vld [vmem:[#allocation5 + $0x918] sm:$0xff]
    %v369 = vld [vmem:[#allocation5 + $0x920] sm:$0xff]
    %v370 = vld [vmem:[#allocation5 + $0x928] sm:$0xff]
    %v371 = vld [vmem:[#allocation5 + $0x930] sm:$0xff]
    %v372 = vld [vmem:[#allocation5 + $0x938] sm:$0xff]
    %v373 = vld [vmem:[#allocation5 + $0x940] sm:$0xff]
    %v374 = vld [vmem:[#allocation5 + $0x948] sm:$0xff]
    %v375 = vld [vmem:[#allocation5 + $0x950] sm:$0xff]
    %v376 = vld [vmem:[#allocation5 + $0x958] sm:$0xff]
    %v377 = vld [vmem:[#allocation5 + $0x960] sm:$0xff]
    %v378 = vld [vmem:[#allocation5 + $0x968] sm:$0xff]
    %v379 = vld [vmem:[#allocation5 + $0x970] sm:$0xff]
    %v380 = vld [vmem:[#allocation5 + $0x978] sm:$0xff]
    %v381 = vld [vmem:[#allocation5 + $0x980] sm:$0xff]
    %v382 = vld [vmem:[#allocation5 + $0x988] sm:$0xff]
    %v383 = vld [vmem:[#allocation5 + $0x990] sm:$0xff]
    %v384 = vld [vmem:[#allocation5 + $0x998] sm:$0xff]
    %v385 = vld [vmem:[#allocation5 + $0x9a0] sm:$0xff]
    %v386 = vld [vmem:[#allocation5 + $0x9a8] sm:$0xff]
    %v387 = vld [vmem:[#allocation5 + $0x9b0] sm:$0xff]
    %v388 = vld [vmem:[#allocation5 + $0x9b8] sm:$0xff]
    %v389 = vld [vmem:[#allocation5 + $0x9c0] sm:$0xff]
    %v390 = vld [vmem:[#allocation5 + $0x9c8] sm:$0xff]
    %v391 = vld [vmem:[#allocation5 + $0x9d0] sm:$0xff]
    %v392 = vld [vmem:[#allocation5 + $0x9d8] sm:$0xff]
    %v393 = vld [vmem:[#allocation5 + $0x9e0] sm:$0xff]
    %v394 = vld [vmem:[#allocation5 + $0x9e8] sm:$0xff]
    %v395 = vld [vmem:[#allocation5 + $0x9f0] sm:$0xff]
    %v396 = vld [vmem:[#allocation5 + $0x9f8] sm:$0xff]
    %v397 = vld [vmem:[#allocation5 + $0xa00] sm:$0xff]
    %v398 = vld [vmem:[#allocation5 + $0xa08] sm:$0xff]
    %v399 = vld [vmem:[#allocation5 + $0xa10] sm:$0xff]
    %v400 = vld [vmem:[#allocation5 + $0xa18] sm:$0xff]
    %v401 = vld [vmem:[#allocation5 + $0xa20] sm:$0xff]
    %v402 = vld [vmem:[#allocation5 + $0xa28] sm:$0xff]
    %v403 = vld [vmem:[#allocation5 + $0xa30] sm:$0xff]
    %v404 = vld [vmem:[#allocation5 + $0xa38] sm:$0xff]
    %v405 = vld [vmem:[#allocation5 + $0xa40] sm:$0xff]
    %v406 = vld [vmem:[#allocation5 + $0xa48] sm:$0xff]
    %v407 = vld [vmem:[#allocation5 + $0xa50] sm:$0xff]
    %v408 = vld [vmem:[#allocation5 + $0xa58] sm:$0xff]
    %v409 = vld [vmem:[#allocation5 + $0xa60] sm:$0xff]
    %v410 = vld [vmem:[#allocation5 + $0xa68] sm:$0xff]
    %v411 = vld [vmem:[#allocation5 + $0xa70] sm:$0xff]
    %v412 = vld [vmem:[#allocation5 + $0xa78] sm:$0xff]
    %v413 = vld [vmem:[#allocation5 + $0xa80] sm:$0xff]
    %v414 = vld [vmem:[#allocation5 + $0xa88] sm:$0xff]
    %v415 = vld [vmem:[#allocation5 + $0xa90] sm:$0xff]
    %v416 = vld [vmem:[#allocation5 + $0xa98] sm:$0xff]
    %v417 = vld [vmem:[#allocation5 + $0xaa0] sm:$0xff]
    %v418 = vld [vmem:[#allocation5 + $0xaa8] sm:$0xff]
    %v419 = vld [vmem:[#allocation5 + $0xab0] sm:$0xff]
    %v420 = vld [vmem:[#allocation5 + $0xab8] sm:$0xff]
    %v421 = vld [vmem:[#allocation5 + $0xac0] sm:$0xff]
    %v422 = vld [vmem:[#allocation5 + $0xac8] sm:$0xff]
    %v423 = vld [vmem:[#allocation5 + $0xad0] sm:$0xff]
    %v424 = vld [vmem:[#allocation5 + $0xad8] sm:$0xff]
    %v425 = vld [vmem:[#allocation5 + $0xae0] sm:$0xff]
    %v426 = vld [vmem:[#allocation5 + $0xae8] sm:$0xff]
    %v427 = vld [vmem:[#allocation5 + $0xaf0] sm:$0xff]
    %v428 = vld [vmem:[#allocation5 + $0xaf8] sm:$0xff]
    %v429 = vld [vmem:[#allocation5 + $0xb00] sm:$0xff]
    %v430 = vld [vmem:[#allocation5 + $0xb08] sm:$0xff]
    %v431 = vld [vmem:[#allocation5 + $0xb10] sm:$0xff]
    %v432 = vld [vmem:[#allocation5 + $0xb18] sm:$0xff]
    %v433 = vld [vmem:[#allocation5 + $0xb20] sm:$0xff]
    %v434 = vld [vmem:[#allocation5 + $0xb28] sm:$0xff]
    %v435 = vld [vmem:[#allocation5 + $0xb30] sm:$0xff]
    %v436 = vld [vmem:[#allocation5 + $0xb38] sm:$0xff]
    %v437 = vld [vmem:[#allocation5 + $0xb40] sm:$0xff]
    %v438 = vld [vmem:[#allocation5 + $0xb48] sm:$0xff]
    %v439 = vld [vmem:[#allocation5 + $0xb50] sm:$0xff]
    %v440 = vld [vmem:[#allocation5 + $0xb58] sm:$0xff]
    %v441 = vld [vmem:[#allocation5 + $0xb60] sm:$0xff]
    %v442 = vld [vmem:[#allocation5 + $0xb68] sm:$0xff]
    %v443 = vld [vmem:[#allocation5 + $0xb70] sm:$0xff]
    %v444 = vld [vmem:[#allocation5 + $0xb78] sm:$0xff]
    %v445 = vld [vmem:[#allocation5 + $0xb80] sm:$0xff]
    %v446 = vld [vmem:[#allocation5 + $0xb88] sm:$0xff]
    %v447 = vld [vmem:[#allocation5 + $0xb90] sm:$0xff]
    %v448 = vld [vmem:[#allocation5 + $0xb98] sm:$0xff]
    %v449 = vld [vmem:[#allocation5 + $0xba0] sm:$0xff]
    %v450 = vld [vmem:[#allocation5 + $0xba8] sm:$0xff]
    %v451 = vld [vmem:[#allocation5 + $0xbb0] sm:$0xff]
    %v452 = vld [vmem:[#allocation5 + $0xbb8] sm:$0xff]
    %v453 = vld [vmem:[#allocation5 + $0xbc0] sm:$0xff]
    %v454 = vld [vmem:[#allocation5 + $0xbc8] sm:$0xff]
    %v455 = vld [vmem:[#allocation5 + $0xbd0] sm:$0xff]
    %v456 = vld [vmem:[#allocation5 + $0xbd8] sm:$0xff]
    %v457 = vld [vmem:[#allocation5 + $0xbe0] sm:$0xff]
    %v458 = vld [vmem:[#allocation5 + $0xbe8] sm:$0xff]
    %v459 = vld [vmem:[#allocation5 + $0xbf0] sm:$0xff]
    %v460 = vld [vmem:[#allocation5 + $0xbf8] sm:$0xff]
    %v461 = vld [vmem:[#allocation7] sm:$0xff]
    %v463 = vlaneseq
    %v464 = vshrl.u32 %v463, 7
    %v465 = vsub.s32 0, %v464
    %v466 = vrot.slane %v461, %v465
    %v467 = vlaneseq
    %v468 = vshrl.u32 %v467, 7
    %v469 = vsub.s32 1, %v468
    %v470 = vrot.slane %v461, %v469
    %v471 = vlaneseq
    %v472 = vshrl.u32 %v471, 7
    %v473 = vsub.s32 2, %v472
    %v474 = vrot.slane %v461, %v473
    %v475 = vlaneseq
    %v476 = vshrl.u32 %v475, 7
    %v477 = vsub.s32 3, %v476
    %v478 = vrot.slane %v461, %v477
    %v479 = vlaneseq
    %v480 = vshrl.u32 %v479, 7
    %v481 = vsub.s32 4, %v480
    %v482 = vrot.slane %v461, %v481
    %v483 = vlaneseq
    %v484 = vshrl.u32 %v483, 7
    %v485 = vsub.s32 5, %v484
    %v486 = vrot.slane %v461, %v485
    %v487 = vlaneseq
    %v488 = vshrl.u32 %v487, 7
    %v489 = vsub.s32 6, %v488
    %v490 = vrot.slane %v461, %v489
    %v491 = vlaneseq
    %v492 = vshrl.u32 %v491, 7
    %v493 = vsub.s32 7, %v492
    %v494 = vrot.slane %v461, %v493
    %v506 = vunpack.c.l.b16 %v74
    %v507 = vunpack.c.h.b16 %v74
    %v508 = vunpack.c.l.b16 %v75
    %v509 = vunpack.c.h.b16 %v75
    %v510 = vunpack.c.l.b16 %v76
    %v511 = vunpack.c.h.b16 %v76
    %v512 = vpack.c.b16 %v506, %v506
    %v513 = vpack.c.b16 %v507, %v507
    %v514 = vpack.c.b16 %v508, %v508
    %v515 = vpack.c.b16 %v509, %v509
    %v516 = vpack.c.b16 %v510, %v510
    %v517 = vpack.c.b16 %v511, %v511
    %v908 = vunpack.c.l.b16 %v77
    %v909 = vunpack.c.h.b16 %v77
    %v910 = vunpack.c.l.b16 %v78
    %v911 = vunpack.c.h.b16 %v78
    %v912 = vunpack.c.l.b16 %v79
    %v913 = vunpack.c.h.b16 %v79
    %v914 = vunpack.c.l.b16 %v80
    %v915 = vunpack.c.h.b16 %v80
    %v916 = vunpack.c.l.b16 %v81
    %v917 = vunpack.c.h.b16 %v81
    %v918 = vunpack.c.l.b16 %v82
    %v919 = vunpack.c.h.b16 %v82
    %v920 = vunpack.c.l.b16 %v83
    %v921 = vunpack.c.h.b16 %v83
    %v922 = vunpack.c.l.b16 %v84
    %v923 = vunpack.c.h.b16 %v84
    %v924 = vunpack.c.l.b16 %v85
    %v925 = vunpack.c.h.b16 %v85
    %v926 = vunpack.c.l.b16 %v86
    %v927 = vunpack.c.h.b16 %v86
    %v928 = vunpack.c.l.b16 %v87
    %v929 = vunpack.c.h.b16 %v87
    %v930 = vunpack.c.l.b16 %v88
    %v931 = vunpack.c.h.b16 %v88
    %v932 = vunpack.c.l.b16 %v89
    %v933 = vunpack.c.h.b16 %v89
    %v934 = vunpack.c.l.b16 %v90
    %v935 = vunpack.c.h.b16 %v90
    %v936 = vunpack.c.l.b16 %v91
    %v937 = vunpack.c.h.b16 %v91
    %v938 = vunpack.c.l.b16 %v92
    %v939 = vunpack.c.h.b16 %v92
    %v940 = vunpack.c.l.b16 %v93
    %v941 = vunpack.c.h.b16 %v93
    %v942 = vunpack.c.l.b16 %v94
    %v943 = vunpack.c.h.b16 %v94
    %v944 = vunpack.c.l.b16 %v95
    %v945 = vunpack.c.h.b16 %v95
    %v946 = vunpack.c.l.b16 %v96
    %v947 = vunpack.c.h.b16 %v96
    %v948 = vunpack.c.l.b16 %v97
    %v949 = vunpack.c.h.b16 %v97
    %v950 = vunpack.c.l.b16 %v98
    %v951 = vunpack.c.h.b16 %v98
    %v952 = vunpack.c.l.b16 %v99
    %v953 = vunpack.c.h.b16 %v99
    %v954 = vunpack.c.l.b16 %v100
    %v955 = vunpack.c.h.b16 %v100
    %v956 = vunpack.c.l.b16 %v101
    %v957 = vunpack.c.h.b16 %v101
    %v958 = vunpack.c.l.b16 %v102
    %v959 = vunpack.c.h.b16 %v102
    %v960 = vunpack.c.l.b16 %v103
    %v961 = vunpack.c.h.b16 %v103
    %v962 = vunpack.c.l.b16 %v104
    %v963 = vunpack.c.h.b16 %v104
    %v964 = vunpack.c.l.b16 %v105
    %v965 = vunpack.c.h.b16 %v105
    %v966 = vunpack.c.l.b16 %v106
    %v967 = vunpack.c.h.b16 %v106
    %v968 = vunpack.c.l.b16 %v107
    %v969 = vunpack.c.h.b16 %v107
    %v970 = vunpack.c.l.b16 %v108
    %v971 = vunpack.c.h.b16 %v108
    %v972 = vunpack.c.l.b16 %v109
    %v973 = vunpack.c.h.b16 %v109
    %v974 = vunpack.c.l.b16 %v110
    %v975 = vunpack.c.h.b16 %v110
    %v976 = vunpack.c.l.b16 %v111
    %v977 = vunpack.c.h.b16 %v111
    %v978 = vunpack.c.l.b16 %v112
    %v979 = vunpack.c.h.b16 %v112
    %v980 = vunpack.c.l.b16 %v113
    %v981 = vunpack.c.h.b16 %v113
    %v982 = vunpack.c.l.b16 %v114
    %v983 = vunpack.c.h.b16 %v114
    %v984 = vunpack.c.l.b16 %v115
    %v985 = vunpack.c.h.b16 %v115
    %v986 = vunpack.c.l.b16 %v116
    %v987 = vunpack.c.h.b16 %v116
    %v988 = vunpack.c.l.b16 %v117
    %v989 = vunpack.c.h.b16 %v117
    %v990 = vunpack.c.l.b16 %v118
    %v991 = vunpack.c.h.b16 %v118
    %v992 = vunpack.c.l.b16 %v119
    %v993 = vunpack.c.h.b16 %v119
    %v994 = vunpack.c.l.b16 %v120
    %v995 = vunpack.c.h.b16 %v120
    %v996 = vunpack.c.l.b16 %v121
    %v997 = vunpack.c.h.b16 %v121
    %v998 = vunpack.c.l.b16 %v122
    %v999 = vunpack.c.h.b16 %v122
    %v1000 = vunpack.c.l.b16 %v123
    %v1001 = vunpack.c.h.b16 %v123
    %v1002 = vunpack.c.l.b16 %v124
    %v1003 = vunpack.c.h.b16 %v124
    %v1004 = vunpack.c.l.b16 %v125
    %v1005 = vunpack.c.h.b16 %v125
    %v1006 = vunpack.c.l.b16 %v126
    %v1007 = vunpack.c.h.b16 %v126
    %v1008 = vunpack.c.l.b16 %v127
    %v1009 = vunpack.c.h.b16 %v127
    %v1010 = vunpack.c.l.b16 %v128
    %v1011 = vunpack.c.h.b16 %v128
    %v1012 = vunpack.c.l.b16 %v129
    %v1013 = vunpack.c.h.b16 %v129
    %v1014 = vunpack.c.l.b16 %v130
    %v1015 = vunpack.c.h.b16 %v130
    %v1016 = vunpack.c.l.b16 %v131
    %v1017 = vunpack.c.h.b16 %v131
    %v1018 = vunpack.c.l.b16 %v132
    %v1019 = vunpack.c.h.b16 %v132
    %v1020 = vunpack.c.l.b16 %v133
    %v1021 = vunpack.c.h.b16 %v133
    %v1022 = vunpack.c.l.b16 %v134
    %v1023 = vunpack.c.h.b16 %v134
    %v1024 = vunpack.c.l.b16 %v135
    %v1025 = vunpack.c.h.b16 %v135
    %v1026 = vunpack.c.l.b16 %v136
    %v1027 = vunpack.c.h.b16 %v136
    %v1028 = vunpack.c.l.b16 %v137
    %v1029 = vunpack.c.h.b16 %v137
    %v1030 = vunpack.c.l.b16 %v138
    %v1031 = vunpack.c.h.b16 %v138
    %v1032 = vunpack.c.l.b16 %v139
    %v1033 = vunpack.c.h.b16 %v139
    %v1034 = vunpack.c.l.b16 %v140
    %v1035 = vunpack.c.h.b16 %v140
    %v1036 = vunpack.c.l.b16 %v141
    %v1037 = vunpack.c.h.b16 %v141
    %v1038 = vunpack.c.l.b16 %v142
    %v1039 = vunpack.c.h.b16 %v142
    %v1040 = vunpack.c.l.b16 %v143
    %v1041 = vunpack.c.h.b16 %v143
    %v1042 = vunpack.c.l.b16 %v144
    %v1043 = vunpack.c.h.b16 %v144
    %v1044 = vunpack.c.l.b16 %v145
    %v1045 = vunpack.c.h.b16 %v145
    %v1046 = vunpack.c.l.b16 %v146
    %v1047 = vunpack.c.h.b16 %v146
    %v1048 = vunpack.c.l.b16 %v147
    %v1049 = vunpack.c.h.b16 %v147
    %v1050 = vunpack.c.l.b16 %v148
    %v1051 = vunpack.c.h.b16 %v148
    %v1052 = vunpack.c.l.b16 %v149
    %v1053 = vunpack.c.h.b16 %v149
    %v1054 = vunpack.c.l.b16 %v150
    %v1055 = vunpack.c.h.b16 %v150
    %v1056 = vunpack.c.l.b16 %v151
    %v1057 = vunpack.c.h.b16 %v151
    %v1058 = vunpack.c.l.b16 %v152
    %v1059 = vunpack.c.h.b16 %v152
    %v1060 = vunpack.c.l.b16 %v153
    %v1061 = vunpack.c.h.b16 %v153
    %v1062 = vunpack.c.l.b16 %v154
    %v1063 = vunpack.c.h.b16 %v154
    %v1064 = vunpack.c.l.b16 %v155
    %v1065 = vunpack.c.h.b16 %v155
    %v1066 = vunpack.c.l.b16 %v156
    %v1067 = vunpack.c.h.b16 %v156
    %v1068 = vunpack.c.l.b16 %v157
    %v1069 = vunpack.c.h.b16 %v157
    %v1070 = vunpack.c.l.b16 %v158
    %v1071 = vunpack.c.h.b16 %v158
    %v1072 = vunpack.c.l.b16 %v159
    %v1073 = vunpack.c.h.b16 %v159
    %v1074 = vunpack.c.l.b16 %v160
    %v1075 = vunpack.c.h.b16 %v160
    %v1076 = vunpack.c.l.b16 %v161
    %v1077 = vunpack.c.h.b16 %v161
    %v1078 = vunpack.c.l.b16 %v162
    %v1079 = vunpack.c.h.b16 %v162
    %v1080 = vunpack.c.l.b16 %v163
    %v1081 = vunpack.c.h.b16 %v163
    %v1082 = vunpack.c.l.b16 %v164
    %v1083 = vunpack.c.h.b16 %v164
    %v1084 = vunpack.c.l.b16 %v165
    %v1085 = vunpack.c.h.b16 %v165
    %v1086 = vunpack.c.l.b16 %v166
    %v1087 = vunpack.c.h.b16 %v166
    %v1088 = vunpack.c.l.b16 %v167
    %v1089 = vunpack.c.h.b16 %v167
    %v1090 = vunpack.c.l.b16 %v168
    %v1091 = vunpack.c.h.b16 %v168
    %v1092 = vunpack.c.l.b16 %v169
    %v1093 = vunpack.c.h.b16 %v169
    %v1094 = vunpack.c.l.b16 %v170
    %v1095 = vunpack.c.h.b16 %v170
    %v1096 = vunpack.c.l.b16 %v171
    %v1097 = vunpack.c.h.b16 %v171
    %v1098 = vunpack.c.l.b16 %v172
    %v1099 = vunpack.c.h.b16 %v172
    %v1100 = vunpack.c.l.b16 %v173
    %v1101 = vunpack.c.h.b16 %v173
    %v1102 = vunpack.c.l.b16 %v174
    %v1103 = vunpack.c.h.b16 %v174
    %v1104 = vunpack.c.l.b16 %v175
    %v1105 = vunpack.c.h.b16 %v175
    %v1106 = vunpack.c.l.b16 %v176
    %v1107 = vunpack.c.h.b16 %v176
    %v1108 = vunpack.c.l.b16 %v177
    %v1109 = vunpack.c.h.b16 %v177
    %v1110 = vunpack.c.l.b16 %v178
    %v1111 = vunpack.c.h.b16 %v178
    %v1112 = vunpack.c.l.b16 %v179
    %v1113 = vunpack.c.h.b16 %v179
    %v1114 = vunpack.c.l.b16 %v180
    %v1115 = vunpack.c.h.b16 %v180
    %v1116 = vunpack.c.l.b16 %v181
    %v1117 = vunpack.c.h.b16 %v181
    %v1118 = vunpack.c.l.b16 %v182
    %v1119 = vunpack.c.h.b16 %v182
    %v1120 = vunpack.c.l.b16 %v183
    %v1121 = vunpack.c.h.b16 %v183
    %v1122 = vunpack.c.l.b16 %v184
    %v1123 = vunpack.c.h.b16 %v184
    %v1124 = vunpack.c.l.b16 %v185
    %v1125 = vunpack.c.h.b16 %v185
    %v1126 = vunpack.c.l.b16 %v186
    %v1127 = vunpack.c.h.b16 %v186
    %v1128 = vunpack.c.l.b16 %v187
    %v1129 = vunpack.c.h.b16 %v187
    %v1130 = vunpack.c.l.b16 %v188
    %v1131 = vunpack.c.h.b16 %v188
    %v1132 = vunpack.c.l.b16 %v189
    %v1133 = vunpack.c.h.b16 %v189
    %v1134 = vunpack.c.l.b16 %v190
    %v1135 = vunpack.c.h.b16 %v190
    %v1136 = vunpack.c.l.b16 %v191
    %v1137 = vunpack.c.h.b16 %v191
    %v1138 = vunpack.c.l.b16 %v192
    %v1139 = vunpack.c.h.b16 %v192
    %v1140 = vunpack.c.l.b16 %v193
    %v1141 = vunpack.c.h.b16 %v193
    %v1142 = vunpack.c.l.b16 %v194
    %v1143 = vunpack.c.h.b16 %v194
    %v1144 = vunpack.c.l.b16 %v195
    %v1145 = vunpack.c.h.b16 %v195
    %v1146 = vunpack.c.l.b16 %v196
    %v1147 = vunpack.c.h.b16 %v196
    %v1148 = vunpack.c.l.b16 %v197
    %v1149 = vunpack.c.h.b16 %v197
    %v1150 = vunpack.c.l.b16 %v198
    %v1151 = vunpack.c.h.b16 %v198
    %v1152 = vunpack.c.l.b16 %v199
    %v1153 = vunpack.c.h.b16 %v199
    %v1154 = vunpack.c.l.b16 %v200
    %v1155 = vunpack.c.h.b16 %v200
    %v1156 = vunpack.c.l.b16 %v201
    %v1157 = vunpack.c.h.b16 %v201
    %v1158 = vunpack.c.l.b16 %v202
    %v1159 = vunpack.c.h.b16 %v202
    %v1160 = vunpack.c.l.b16 %v203
    %v1161 = vunpack.c.h.b16 %v203
    %v1162 = vunpack.c.l.b16 %v204
    %v1163 = vunpack.c.h.b16 %v204
    %v1164 = vunpack.c.l.b16 %v205
    %v1165 = vunpack.c.h.b16 %v205
    %v1166 = vunpack.c.l.b16 %v206
    %v1167 = vunpack.c.h.b16 %v206
    %v1168 = vunpack.c.l.b16 %v207
    %v1169 = vunpack.c.h.b16 %v207
    %v1170 = vunpack.c.l.b16 %v208
    %v1171 = vunpack.c.h.b16 %v208
    %v1172 = vunpack.c.l.b16 %v209
    %v1173 = vunpack.c.h.b16 %v209
    %v1174 = vunpack.c.l.b16 %v210
    %v1175 = vunpack.c.h.b16 %v210
    %v1176 = vunpack.c.l.b16 %v211
    %v1177 = vunpack.c.h.b16 %v211
    %v1178 = vunpack.c.l.b16 %v212
    %v1179 = vunpack.c.h.b16 %v212
    %v1180 = vunpack.c.l.b16 %v213
    %v1181 = vunpack.c.h.b16 %v213
    %v1182 = vunpack.c.l.b16 %v214
    %v1183 = vunpack.c.h.b16 %v214
    %v1184 = vunpack.c.l.b16 %v215
    %v1185 = vunpack.c.h.b16 %v215
    %v1186 = vunpack.c.l.b16 %v216
    %v1187 = vunpack.c.h.b16 %v216
    %v1188 = vunpack.c.l.b16 %v217
    %v1189 = vunpack.c.h.b16 %v217
    %v1190 = vunpack.c.l.b16 %v218
    %v1191 = vunpack.c.h.b16 %v218
    %v1192 = vunpack.c.l.b16 %v219
    %v1193 = vunpack.c.h.b16 %v219
    %v1194 = vunpack.c.l.b16 %v220
    %v1195 = vunpack.c.h.b16 %v220
    %v1196 = vunpack.c.l.b16 %v221
    %v1197 = vunpack.c.h.b16 %v221
    %v1198 = vunpack.c.l.b16 %v222
    %v1199 = vunpack.c.h.b16 %v222
    %v1200 = vunpack.c.l.b16 %v223
    %v1201 = vunpack.c.h.b16 %v223
    %v1202 = vunpack.c.l.b16 %v224
    %v1203 = vunpack.c.h.b16 %v224
    %v1204 = vunpack.c.l.b16 %v225
    %v1205 = vunpack.c.h.b16 %v225
    %v1206 = vunpack.c.l.b16 %v226
    %v1207 = vunpack.c.h.b16 %v226
    %v1208 = vunpack.c.l.b16 %v227
    %v1209 = vunpack.c.h.b16 %v227
    %v1210 = vunpack.c.l.b16 %v228
    %v1211 = vunpack.c.h.b16 %v228
    %v1212 = vunpack.c.l.b16 %v229
    %v1213 = vunpack.c.h.b16 %v229
    %v1214 = vunpack.c.l.b16 %v230
    %v1215 = vunpack.c.h.b16 %v230
    %v1216 = vunpack.c.l.b16 %v231
    %v1217 = vunpack.c.h.b16 %v231
    %v1218 = vunpack.c.l.b16 %v232
    %v1219 = vunpack.c.h.b16 %v232
    %v1220 = vunpack.c.l.b16 %v233
    %v1221 = vunpack.c.h.b16 %v233
    %v1222 = vunpack.c.l.b16 %v234
    %v1223 = vunpack.c.h.b16 %v234
    %v1224 = vunpack.c.l.b16 %v235
    %v1225 = vunpack.c.h.b16 %v235
    %v1226 = vunpack.c.l.b16 %v236
    %v1227 = vunpack.c.h.b16 %v236
    %v1228 = vunpack.c.l.b16 %v237
    %v1229 = vunpack.c.h.b16 %v237
    %v1230 = vunpack.c.l.b16 %v238
    %v1231 = vunpack.c.h.b16 %v238
    %v1232 = vunpack.c.l.b16 %v239
    %v1233 = vunpack.c.h.b16 %v239
    %v1234 = vunpack.c.l.b16 %v240
    %v1235 = vunpack.c.h.b16 %v240
    %v1236 = vunpack.c.l.b16 %v241
    %v1237 = vunpack.c.h.b16 %v241
    %v1238 = vunpack.c.l.b16 %v242
    %v1239 = vunpack.c.h.b16 %v242
    %v1240 = vunpack.c.l.b16 %v243
    %v1241 = vunpack.c.h.b16 %v243
    %v1242 = vunpack.c.l.b16 %v244
    %v1243 = vunpack.c.h.b16 %v244
    %v1244 = vunpack.c.l.b16 %v245
    %v1245 = vunpack.c.h.b16 %v245
    %v1246 = vunpack.c.l.b16 %v246
    %v1247 = vunpack.c.h.b16 %v246
    %v1248 = vunpack.c.l.b16 %v247
    %v1249 = vunpack.c.h.b16 %v247
    %v1250 = vunpack.c.l.b16 %v248
    %v1251 = vunpack.c.h.b16 %v248
    %v1252 = vunpack.c.l.b16 %v249
    %v1253 = vunpack.c.h.b16 %v249
    %v1254 = vunpack.c.l.b16 %v250
    %v1255 = vunpack.c.h.b16 %v250
    %v1256 = vunpack.c.l.b16 %v251
    %v1257 = vunpack.c.h.b16 %v251
    %v1258 = vunpack.c.l.b16 %v252
    %v1259 = vunpack.c.h.b16 %v252
    %v1260 = vunpack.c.l.b16 %v253
    %v1261 = vunpack.c.h.b16 %v253
    %v1262 = vunpack.c.l.b16 %v254
    %v1263 = vunpack.c.h.b16 %v254
    %v1264 = vunpack.c.l.b16 %v255
    %v1265 = vunpack.c.h.b16 %v255
    %v1266 = vunpack.c.l.b16 %v256
    %v1267 = vunpack.c.h.b16 %v256
    %v1268 = vunpack.c.l.b16 %v257
    %v1269 = vunpack.c.h.b16 %v257
    %v1270 = vunpack.c.l.b16 %v258
    %v1271 = vunpack.c.h.b16 %v258
    %v1272 = vunpack.c.l.b16 %v259
    %v1273 = vunpack.c.h.b16 %v259
    %v1274 = vunpack.c.l.b16 %v260
    %v1275 = vunpack.c.h.b16 %v260
    %v1276 = vunpack.c.l.b16 %v261
    %v1277 = vunpack.c.h.b16 %v261
    %v1278 = vunpack.c.l.b16 %v262
    %v1279 = vunpack.c.h.b16 %v262
    %v1280 = vunpack.c.l.b16 %v263
    %v1281 = vunpack.c.h.b16 %v263
    %v1282 = vunpack.c.l.b16 %v264
    %v1283 = vunpack.c.h.b16 %v264
    %v1284 = vunpack.c.l.b16 %v265
    %v1285 = vunpack.c.h.b16 %v265
    %v1286 = vunpack.c.l.b16 %v266
    %v1287 = vunpack.c.h.b16 %v266
    %v1288 = vunpack.c.l.b16 %v267
    %v1289 = vunpack.c.h.b16 %v267
    %v1290 = vunpack.c.l.b16 %v268
    %v1291 = vunpack.c.h.b16 %v268
    %v1292 = vunpack.c.l.b16 %v269
    %v1293 = vunpack.c.h.b16 %v269
    %v1294 = vunpack.c.l.b16 %v270
    %v1295 = vunpack.c.h.b16 %v270
    %v1296 = vunpack.c.l.b16 %v271
    %v1297 = vunpack.c.h.b16 %v271
    %v1298 = vunpack.c.l.b16 %v272
    %v1299 = vunpack.c.h.b16 %v272
    %v1300 = vunpack.c.l.b16 %v273
    %v1301 = vunpack.c.h.b16 %v273
    %v1302 = vunpack.c.l.b16 %v274
    %v1303 = vunpack.c.h.b16 %v274
    %v1304 = vunpack.c.l.b16 %v275
    %v1305 = vunpack.c.h.b16 %v275
    %v1306 = vunpack.c.l.b16 %v276
    %v1307 = vunpack.c.h.b16 %v276
    %v1308 = vunpack.c.l.b16 %v277
    %v1309 = vunpack.c.h.b16 %v277
    %v1310 = vunpack.c.l.b16 %v278
    %v1311 = vunpack.c.h.b16 %v278
    %v1312 = vunpack.c.l.b16 %v279
    %v1313 = vunpack.c.h.b16 %v279
    %v1314 = vunpack.c.l.b16 %v280
    %v1315 = vunpack.c.h.b16 %v280
    %v1316 = vunpack.c.l.b16 %v281
    %v1317 = vunpack.c.h.b16 %v281
    %v1318 = vunpack.c.l.b16 %v282
    %v1319 = vunpack.c.h.b16 %v282
    %v1320 = vunpack.c.l.b16 %v283
    %v1321 = vunpack.c.h.b16 %v283
    %v1322 = vunpack.c.l.b16 %v284
    %v1323 = vunpack.c.h.b16 %v284
    %v1324 = vunpack.c.l.b16 %v285
    %v1325 = vunpack.c.h.b16 %v285
    %v1326 = vunpack.c.l.b16 %v286
    %v1327 = vunpack.c.h.b16 %v286
    %v1328 = vunpack.c.l.b16 %v287
    %v1329 = vunpack.c.h.b16 %v287
    %v1330 = vunpack.c.l.b16 %v288
    %v1331 = vunpack.c.h.b16 %v288
    %v1332 = vunpack.c.l.b16 %v289
    %v1333 = vunpack.c.h.b16 %v289
    %v1334 = vunpack.c.l.b16 %v290
    %v1335 = vunpack.c.h.b16 %v290
    %v1336 = vunpack.c.l.b16 %v291
    %v1337 = vunpack.c.h.b16 %v291
    %v1338 = vunpack.c.l.b16 %v292
    %v1339 = vunpack.c.h.b16 %v292
    %v1340 = vunpack.c.l.b16 %v293
    %v1341 = vunpack.c.h.b16 %v293
    %v1342 = vunpack.c.l.b16 %v294
    %v1343 = vunpack.c.h.b16 %v294
    %v1344 = vunpack.c.l.b16 %v295
    %v1345 = vunpack.c.h.b16 %v295
    %v1346 = vunpack.c.l.b16 %v296
    %v1347 = vunpack.c.h.b16 %v296
    %v1348 = vunpack.c.l.b16 %v297
    %v1349 = vunpack.c.h.b16 %v297
    %v1350 = vunpack.c.l.b16 %v298
    %v1351 = vunpack.c.h.b16 %v298
    %v1352 = vunpack.c.l.b16 %v299
    %v1353 = vunpack.c.h.b16 %v299
    %v1354 = vunpack.c.l.b16 %v300
    %v1355 = vunpack.c.h.b16 %v300
    %v1356 = vunpack.c.l.b16 %v301
    %v1357 = vunpack.c.h.b16 %v301
    %v1358 = vunpack.c.l.b16 %v302
    %v1359 = vunpack.c.h.b16 %v302
    %v1360 = vunpack.c.l.b16 %v303
    %v1361 = vunpack.c.h.b16 %v303
    %v1362 = vunpack.c.l.b16 %v304
    %v1363 = vunpack.c.h.b16 %v304
    %v1364 = vunpack.c.l.b16 %v305
    %v1365 = vunpack.c.h.b16 %v305
    %v1366 = vunpack.c.l.b16 %v306
    %v1367 = vunpack.c.h.b16 %v306
    %v1368 = vunpack.c.l.b16 %v307
    %v1369 = vunpack.c.h.b16 %v307
    %v1370 = vunpack.c.l.b16 %v308
    %v1371 = vunpack.c.h.b16 %v308
    %v1372 = vunpack.c.l.b16 %v309
    %v1373 = vunpack.c.h.b16 %v309
    %v1374 = vunpack.c.l.b16 %v310
    %v1375 = vunpack.c.h.b16 %v310
    %v1376 = vunpack.c.l.b16 %v311
    %v1377 = vunpack.c.h.b16 %v311
    %v1378 = vunpack.c.l.b16 %v312
    %v1379 = vunpack.c.h.b16 %v312
    %v1380 = vunpack.c.l.b16 %v313
    %v1381 = vunpack.c.h.b16 %v313
    %v1382 = vunpack.c.l.b16 %v314
    %v1383 = vunpack.c.h.b16 %v314
    %v1384 = vunpack.c.l.b16 %v315
    %v1385 = vunpack.c.h.b16 %v315
    %v1386 = vunpack.c.l.b16 %v316
    %v1387 = vunpack.c.h.b16 %v316
    %v1388 = vunpack.c.l.b16 %v317
    %v1389 = vunpack.c.h.b16 %v317
    %v1390 = vunpack.c.l.b16 %v318
    %v1391 = vunpack.c.h.b16 %v318
    %v1392 = vunpack.c.l.b16 %v319
    %v1393 = vunpack.c.h.b16 %v319
    %v1394 = vunpack.c.l.b16 %v320
    %v1395 = vunpack.c.h.b16 %v320
    %v1396 = vunpack.c.l.b16 %v321
    %v1397 = vunpack.c.h.b16 %v321
    %v1398 = vunpack.c.l.b16 %v322
    %v1399 = vunpack.c.h.b16 %v322
    %v1400 = vunpack.c.l.b16 %v323
    %v1401 = vunpack.c.h.b16 %v323
    %v1402 = vunpack.c.l.b16 %v324
    %v1403 = vunpack.c.h.b16 %v324
    %v1404 = vunpack.c.l.b16 %v325
    %v1405 = vunpack.c.h.b16 %v325
    %v1406 = vunpack.c.l.b16 %v326
    %v1407 = vunpack.c.h.b16 %v326
    %v1408 = vunpack.c.l.b16 %v327
    %v1409 = vunpack.c.h.b16 %v327
    %v1410 = vunpack.c.l.b16 %v328
    %v1411 = vunpack.c.h.b16 %v328
    %v1412 = vunpack.c.l.b16 %v329
    %v1413 = vunpack.c.h.b16 %v329
    %v1414 = vunpack.c.l.b16 %v330
    %v1415 = vunpack.c.h.b16 %v330
    %v1416 = vunpack.c.l.b16 %v331
    %v1417 = vunpack.c.h.b16 %v331
    %v1418 = vunpack.c.l.b16 %v332
    %v1419 = vunpack.c.h.b16 %v332
    %v1420 = vunpack.c.l.b16 %v333
    %v1421 = vunpack.c.h.b16 %v333
    %v1422 = vunpack.c.l.b16 %v334
    %v1423 = vunpack.c.h.b16 %v334
    %v1424 = vunpack.c.l.b16 %v335
    %v1425 = vunpack.c.h.b16 %v335
    %v1426 = vunpack.c.l.b16 %v336
    %v1427 = vunpack.c.h.b16 %v336
    %v1428 = vunpack.c.l.b16 %v337
    %v1429 = vunpack.c.h.b16 %v337
    %v1430 = vunpack.c.l.b16 %v338
    %v1431 = vunpack.c.h.b16 %v338
    %v1432 = vunpack.c.l.b16 %v339
    %v1433 = vunpack.c.h.b16 %v339
    %v1434 = vunpack.c.l.b16 %v340
    %v1435 = vunpack.c.h.b16 %v340
    %v1436 = vunpack.c.l.b16 %v341
    %v1437 = vunpack.c.h.b16 %v341
    %v1438 = vunpack.c.l.b16 %v342
    %v1439 = vunpack.c.h.b16 %v342
    %v1440 = vunpack.c.l.b16 %v343
    %v1441 = vunpack.c.h.b16 %v343
    %v1442 = vunpack.c.l.b16 %v344
    %v1443 = vunpack.c.h.b16 %v344
    %v1444 = vunpack.c.l.b16 %v345
    %v1445 = vunpack.c.h.b16 %v345
    %v1446 = vunpack.c.l.b16 %v346
    %v1447 = vunpack.c.h.b16 %v346
    %v1448 = vunpack.c.l.b16 %v347
    %v1449 = vunpack.c.h.b16 %v347
    %v1450 = vunpack.c.l.b16 %v348
    %v1451 = vunpack.c.h.b16 %v348
    %v1452 = vunpack.c.l.b16 %v349
    %v1453 = vunpack.c.h.b16 %v349
    %v1454 = vunpack.c.l.b16 %v350
    %v1455 = vunpack.c.h.b16 %v350
    %v1456 = vunpack.c.l.b16 %v351
    %v1457 = vunpack.c.h.b16 %v351
    %v1458 = vunpack.c.l.b16 %v352
    %v1459 = vunpack.c.h.b16 %v352
    %v1460 = vunpack.c.l.b16 %v353
    %v1461 = vunpack.c.h.b16 %v353
    %v1462 = vunpack.c.l.b16 %v354
    %v1463 = vunpack.c.h.b16 %v354
    %v1464 = vunpack.c.l.b16 %v355
    %v1465 = vunpack.c.h.b16 %v355
    %v1466 = vunpack.c.l.b16 %v356
    %v1467 = vunpack.c.h.b16 %v356
    %v1468 = vunpack.c.l.b16 %v357
    %v1469 = vunpack.c.h.b16 %v357
    %v1470 = vunpack.c.l.b16 %v358
    %v1471 = vunpack.c.h.b16 %v358
    %v1472 = vunpack.c.l.b16 %v359
    %v1473 = vunpack.c.h.b16 %v359
    %v1474 = vunpack.c.l.b16 %v360
    %v1475 = vunpack.c.h.b16 %v360
    %v1476 = vunpack.c.l.b16 %v361
    %v1477 = vunpack.c.h.b16 %v361
    %v1478 = vunpack.c.l.b16 %v362
    %v1479 = vunpack.c.h.b16 %v362
    %v1480 = vunpack.c.l.b16 %v363
    %v1481 = vunpack.c.h.b16 %v363
    %v1482 = vunpack.c.l.b16 %v364
    %v1483 = vunpack.c.h.b16 %v364
    %v1484 = vunpack.c.l.b16 %v365
    %v1485 = vunpack.c.h.b16 %v365
    %v1486 = vunpack.c.l.b16 %v366
    %v1487 = vunpack.c.h.b16 %v366
    %v1488 = vunpack.c.l.b16 %v367
    %v1489 = vunpack.c.h.b16 %v367
    %v1490 = vunpack.c.l.b16 %v368
    %v1491 = vunpack.c.h.b16 %v368
    %v1492 = vunpack.c.l.b16 %v369
    %v1493 = vunpack.c.h.b16 %v369
    %v1494 = vunpack.c.l.b16 %v370
    %v1495 = vunpack.c.h.b16 %v370
    %v1496 = vunpack.c.l.b16 %v371
    %v1497 = vunpack.c.h.b16 %v371
    %v1498 = vunpack.c.l.b16 %v372
    %v1499 = vunpack.c.h.b16 %v372
    %v1500 = vunpack.c.l.b16 %v373
    %v1501 = vunpack.c.h.b16 %v373
    %v1502 = vunpack.c.l.b16 %v374
    %v1503 = vunpack.c.h.b16 %v374
    %v1504 = vunpack.c.l.b16 %v375
    %v1505 = vunpack.c.h.b16 %v375
    %v1506 = vunpack.c.l.b16 %v376
    %v1507 = vunpack.c.h.b16 %v376
    %v1508 = vunpack.c.l.b16 %v377
    %v1509 = vunpack.c.h.b16 %v377
    %v1510 = vunpack.c.l.b16 %v378
    %v1511 = vunpack.c.h.b16 %v378
    %v1512 = vunpack.c.l.b16 %v379
    %v1513 = vunpack.c.h.b16 %v379
    %v1514 = vunpack.c.l.b16 %v380
    %v1515 = vunpack.c.h.b16 %v380
    %v1516 = vunpack.c.l.b16 %v381
    %v1517 = vunpack.c.h.b16 %v381
    %v1518 = vunpack.c.l.b16 %v382
    %v1519 = vunpack.c.h.b16 %v382
    %v1520 = vunpack.c.l.b16 %v383
    %v1521 = vunpack.c.h.b16 %v383
    %v1522 = vunpack.c.l.b16 %v384
    %v1523 = vunpack.c.h.b16 %v384
    %v1524 = vunpack.c.l.b16 %v385
    %v1525 = vunpack.c.h.b16 %v385
    %v1526 = vunpack.c.l.b16 %v386
    %v1527 = vunpack.c.h.b16 %v386
    %v1528 = vunpack.c.l.b16 %v387
    %v1529 = vunpack.c.h.b16 %v387
    %v1530 = vunpack.c.l.b16 %v388
    %v1531 = vunpack.c.h.b16 %v388
    %v1532 = vunpack.c.l.b16 %v389
    %v1533 = vunpack.c.h.b16 %v389
    %v1534 = vunpack.c.l.b16 %v390
    %v1535 = vunpack.c.h.b16 %v390
    %v1536 = vunpack.c.l.b16 %v391
    %v1537 = vunpack.c.h.b16 %v391
    %v1538 = vunpack.c.l.b16 %v392
    %v1539 = vunpack.c.h.b16 %v392
    %v1540 = vunpack.c.l.b16 %v393
    %v1541 = vunpack.c.h.b16 %v393
    %v1542 = vunpack.c.l.b16 %v394
    %v1543 = vunpack.c.h.b16 %v394
    %v1544 = vunpack.c.l.b16 %v395
    %v1545 = vunpack.c.h.b16 %v395
    %v1546 = vunpack.c.l.b16 %v396
    %v1547 = vunpack.c.h.b16 %v396
    %v1548 = vunpack.c.l.b16 %v397
    %v1549 = vunpack.c.h.b16 %v397
    %v1550 = vunpack.c.l.b16 %v398
    %v1551 = vunpack.c.h.b16 %v398
    %v1552 = vunpack.c.l.b16 %v399
    %v1553 = vunpack.c.h.b16 %v399
    %v1554 = vunpack.c.l.b16 %v400
    %v1555 = vunpack.c.h.b16 %v400
    %v1556 = vunpack.c.l.b16 %v401
    %v1557 = vunpack.c.h.b16 %v401
    %v1558 = vunpack.c.l.b16 %v402
    %v1559 = vunpack.c.h.b16 %v402
    %v1560 = vunpack.c.l.b16 %v403
    %v1561 = vunpack.c.h.b16 %v403
    %v1562 = vunpack.c.l.b16 %v404
    %v1563 = vunpack.c.h.b16 %v404
    %v1564 = vunpack.c.l.b16 %v405
    %v1565 = vunpack.c.h.b16 %v405
    %v1566 = vunpack.c.l.b16 %v406
    %v1567 = vunpack.c.h.b16 %v406
    %v1568 = vunpack.c.l.b16 %v407
    %v1569 = vunpack.c.h.b16 %v407
    %v1570 = vunpack.c.l.b16 %v408
    %v1571 = vunpack.c.h.b16 %v408
    %v1572 = vunpack.c.l.b16 %v409
    %v1573 = vunpack.c.h.b16 %v409
    %v1574 = vunpack.c.l.b16 %v410
    %v1575 = vunpack.c.h.b16 %v410
    %v1576 = vunpack.c.l.b16 %v411
    %v1577 = vunpack.c.h.b16 %v411
    %v1578 = vunpack.c.l.b16 %v412
    %v1579 = vunpack.c.h.b16 %v412
    %v1580 = vunpack.c.l.b16 %v413
    %v1581 = vunpack.c.h.b16 %v413
    %v1582 = vunpack.c.l.b16 %v414
    %v1583 = vunpack.c.h.b16 %v414
    %v1584 = vunpack.c.l.b16 %v415
    %v1585 = vunpack.c.h.b16 %v415
    %v1586 = vunpack.c.l.b16 %v416
    %v1587 = vunpack.c.h.b16 %v416
    %v1588 = vunpack.c.l.b16 %v417
    %v1589 = vunpack.c.h.b16 %v417
    %v1590 = vunpack.c.l.b16 %v418
    %v1591 = vunpack.c.h.b16 %v418
    %v1592 = vunpack.c.l.b16 %v419
    %v1593 = vunpack.c.h.b16 %v419
    %v1594 = vunpack.c.l.b16 %v420
    %v1595 = vunpack.c.h.b16 %v420
    %v1596 = vunpack.c.l.b16 %v421
    %v1597 = vunpack.c.h.b16 %v421
    %v1598 = vunpack.c.l.b16 %v422
    %v1599 = vunpack.c.h.b16 %v422
    %v1600 = vunpack.c.l.b16 %v423
    %v1601 = vunpack.c.h.b16 %v423
    %v1602 = vunpack.c.l.b16 %v424
    %v1603 = vunpack.c.h.b16 %v424
    %v1604 = vunpack.c.l.b16 %v425
    %v1605 = vunpack.c.h.b16 %v425
    %v1606 = vunpack.c.l.b16 %v426
    %v1607 = vunpack.c.h.b16 %v426
    %v1608 = vunpack.c.l.b16 %v427
    %v1609 = vunpack.c.h.b16 %v427
    %v1610 = vunpack.c.l.b16 %v428
    %v1611 = vunpack.c.h.b16 %v428
    %v1612 = vunpack.c.l.b16 %v429
    %v1613 = vunpack.c.h.b16 %v429
    %v1614 = vunpack.c.l.b16 %v430
    %v1615 = vunpack.c.h.b16 %v430
    %v1616 = vunpack.c.l.b16 %v431
    %v1617 = vunpack.c.h.b16 %v431
    %v1618 = vunpack.c.l.b16 %v432
    %v1619 = vunpack.c.h.b16 %v432
    %v1620 = vunpack.c.l.b16 %v433
    %v1621 = vunpack.c.h.b16 %v433
    %v1622 = vunpack.c.l.b16 %v434
    %v1623 = vunpack.c.h.b16 %v434
    %v1624 = vunpack.c.l.b16 %v435
    %v1625 = vunpack.c.h.b16 %v435
    %v1626 = vunpack.c.l.b16 %v436
    %v1627 = vunpack.c.h.b16 %v436
    %v1628 = vunpack.c.l.b16 %v437
    %v1629 = vunpack.c.h.b16 %v437
    %v1630 = vunpack.c.l.b16 %v438
    %v1631 = vunpack.c.h.b16 %v438
    %v1632 = vunpack.c.l.b16 %v439
    %v1633 = vunpack.c.h.b16 %v439
    %v1634 = vunpack.c.l.b16 %v440
    %v1635 = vunpack.c.h.b16 %v440
    %v1636 = vunpack.c.l.b16 %v441
    %v1637 = vunpack.c.h.b16 %v441
    %v1638 = vunpack.c.l.b16 %v442
    %v1639 = vunpack.c.h.b16 %v442
    %v1640 = vunpack.c.l.b16 %v443
    %v1641 = vunpack.c.h.b16 %v443
    %v1642 = vunpack.c.l.b16 %v444
    %v1643 = vunpack.c.h.b16 %v444
    %v1644 = vunpack.c.l.b16 %v445
    %v1645 = vunpack.c.h.b16 %v445
    %v1646 = vunpack.c.l.b16 %v446
    %v1647 = vunpack.c.h.b16 %v446
    %v1648 = vunpack.c.l.b16 %v447
    %v1649 = vunpack.c.h.b16 %v447
    %v1650 = vunpack.c.l.b16 %v448
    %v1651 = vunpack.c.h.b16 %v448
    %v1652 = vunpack.c.l.b16 %v449
    %v1653 = vunpack.c.h.b16 %v449
    %v1654 = vunpack.c.l.b16 %v450
    %v1655 = vunpack.c.h.b16 %v450
    %v1656 = vunpack.c.l.b16 %v451
    %v1657 = vunpack.c.h.b16 %v451
    %v1658 = vunpack.c.l.b16 %v452
    %v1659 = vunpack.c.h.b16 %v452
    %v1660 = vunpack.c.l.b16 %v453
    %v1661 = vunpack.c.h.b16 %v453
    %v1662 = vunpack.c.l.b16 %v454
    %v1663 = vunpack.c.h.b16 %v454
    %v1664 = vunpack.c.l.b16 %v455
    %v1665 = vunpack.c.h.b16 %v455
    %v1666 = vunpack.c.l.b16 %v456
    %v1667 = vunpack.c.h.b16 %v456
    %v1668 = vunpack.c.l.b16 %v457
    %v1669 = vunpack.c.h.b16 %v457
    %v1670 = vunpack.c.l.b16 %v458
    %v1671 = vunpack.c.h.b16 %v458
    %v1672 = vunpack.c.l.b16 %v459
    %v1673 = vunpack.c.h.b16 %v459
    %v1674 = vunpack.c.l.b16 %v460
    %v1675 = vunpack.c.h.b16 %v460
    %v1676 = vpack.c.b16 %v916, %v908
    %v1677 = vpack.c.b16 %v917, %v909
    %v1678 = vpack.c.b16 %v918, %v910
    %v1679 = vpack.c.b16 %v919, %v911
    %v1680 = vpack.c.b16 %v920, %v912
    %v1681 = vpack.c.b16 %v921, %v913
    %v1682 = vpack.c.b16 %v922, %v914
    %v1683 = vpack.c.b16 %v923, %v915
    %v1684 = vpack.c.b16 %v932, %v924
    %v1685 = vpack.c.b16 %v933, %v925
    %v1686 = vpack.c.b16 %v934, %v926
    %v1687 = vpack.c.b16 %v935, %v927
    %v1688 = vpack.c.b16 %v936, %v928
    %v1689 = vpack.c.b16 %v937, %v929
    %v1690 = vpack.c.b16 %v938, %v930
    %v1691 = vpack.c.b16 %v939, %v931
    %v1692 = vpack.c.b16 %v948, %v940
    %v1693 = vpack.c.b16 %v949, %v941
    %v1694 = vpack.c.b16 %v950, %v942
    %v1695 = vpack.c.b16 %v951, %v943
    %v1696 = vpack.c.b16 %v952, %v944
    %v1697 = vpack.c.b16 %v953, %v945
    %v1698 = vpack.c.b16 %v954, %v946
    %v1699 = vpack.c.b16 %v955, %v947
    %v1700 = vpack.c.b16 %v964, %v956
    %v1701 = vpack.c.b16 %v965, %v957
    %v1702 = vpack.c.b16 %v966, %v958
    %v1703 = vpack.c.b16 %v967, %v959
    %v1704 = vpack.c.b16 %v968, %v960
    %v1705 = vpack.c.b16 %v969, %v961
    %v1706 = vpack.c.b16 %v970, %v962
    %v1707 = vpack.c.b16 %v971, %v963
    %v1708 = vpack.c.b16 %v980, %v972
    %v1709 = vpack.c.b16 %v981, %v973
    %v1710 = vpack.c.b16 %v982, %v974
    %v1711 = vpack.c.b16 %v983, %v975
    %v1712 = vpack.c.b16 %v984, %v976
    %v1713 = vpack.c.b16 %v985, %v977
    %v1714 = vpack.c.b16 %v986, %v978
    %v1715 = vpack.c.b16 %v987, %v979
    %v1716 = vpack.c.b16 %v996, %v988
    %v1717 = vpack.c.b16 %v997, %v989
    %v1718 = vpack.c.b16 %v998, %v990
    %v1719 = vpack.c.b16 %v999, %v991
    %v1720 = vpack.c.b16 %v1000, %v992
    %v1721 = vpack.c.b16 %v1001, %v993
    %v1722 = vpack.c.b16 %v1002, %v994
    %v1723 = vpack.c.b16 %v1003, %v995
    %v1724 = vpack.c.b16 %v1012, %v1004
    %v1725 = vpack.c.b16 %v1013, %v1005
    %v1726 = vpack.c.b16 %v1014, %v1006
    %v1727 = vpack.c.b16 %v1015, %v1007
    %v1728 = vpack.c.b16 %v1016, %v1008
    %v1729 = vpack.c.b16 %v1017, %v1009
    %v1730 = vpack.c.b16 %v1018, %v1010
    %v1731 = vpack.c.b16 %v1019, %v1011
    %v1732 = vpack.c.b16 %v1028, %v1020
    %v1733 = vpack.c.b16 %v1029, %v1021
    %v1734 = vpack.c.b16 %v1030, %v1022
    %v1735 = vpack.c.b16 %v1031, %v1023
    %v1736 = vpack.c.b16 %v1032, %v1024
    %v1737 = vpack.c.b16 %v1033, %v1025
    %v1738 = vpack.c.b16 %v1034, %v1026
    %v1739 = vpack.c.b16 %v1035, %v1027
    %v1740 = vpack.c.b16 %v1044, %v1036
    %v1741 = vpack.c.b16 %v1045, %v1037
    %v1742 = vpack.c.b16 %v1046, %v1038
    %v1743 = vpack.c.b16 %v1047, %v1039
    %v1744 = vpack.c.b16 %v1048, %v1040
    %v1745 = vpack.c.b16 %v1049, %v1041
    %v1746 = vpack.c.b16 %v1050, %v1042
    %v1747 = vpack.c.b16 %v1051, %v1043
    %v1748 = vpack.c.b16 %v1060, %v1052
    %v1749 = vpack.c.b16 %v1061, %v1053
    %v1750 = vpack.c.b16 %v1062, %v1054
    %v1751 = vpack.c.b16 %v1063, %v1055
    %v1752 = vpack.c.b16 %v1064, %v1056
    %v1753 = vpack.c.b16 %v1065, %v1057
    %v1754 = vpack.c.b16 %v1066, %v1058
    %v1755 = vpack.c.b16 %v1067, %v1059
    %v1756 = vpack.c.b16 %v1076, %v1068
    %v1757 = vpack.c.b16 %v1077, %v1069
    %v1758 = vpack.c.b16 %v1078, %v1070
    %v1759 = vpack.c.b16 %v1079, %v1071
    %v1760 = vpack.c.b16 %v1080, %v1072
    %v1761 = vpack.c.b16 %v1081, %v1073
    %v1762 = vpack.c.b16 %v1082, %v1074
    %v1763 = vpack.c.b16 %v1083, %v1075
    %v1764 = vpack.c.b16 %v1092, %v1084
    %v1765 = vpack.c.b16 %v1093, %v1085
    %v1766 = vpack.c.b16 %v1094, %v1086
    %v1767 = vpack.c.b16 %v1095, %v1087
    %v1768 = vpack.c.b16 %v1096, %v1088
    %v1769 = vpack.c.b16 %v1097, %v1089
    %v1770 = vpack.c.b16 %v1098, %v1090
    %v1771 = vpack.c.b16 %v1099, %v1091
    %v1772 = vpack.c.b16 %v1108, %v1100
    %v1773 = vpack.c.b16 %v1109, %v1101
    %v1774 = vpack.c.b16 %v1110, %v1102
    %v1775 = vpack.c.b16 %v1111, %v1103
    %v1776 = vpack.c.b16 %v1112, %v1104
    %v1777 = vpack.c.b16 %v1113, %v1105
    %v1778 = vpack.c.b16 %v1114, %v1106
    %v1779 = vpack.c.b16 %v1115, %v1107
    %v1780 = vpack.c.b16 %v1124, %v1116
    %v1781 = vpack.c.b16 %v1125, %v1117
    %v1782 = vpack.c.b16 %v1126, %v1118
    %v1783 = vpack.c.b16 %v1127, %v1119
    %v1784 = vpack.c.b16 %v1128, %v1120
    %v1785 = vpack.c.b16 %v1129, %v1121
    %v1786 = vpack.c.b16 %v1130, %v1122
    %v1787 = vpack.c.b16 %v1131, %v1123
    %v1788 = vpack.c.b16 %v1140, %v1132
    %v1789 = vpack.c.b16 %v1141, %v1133
    %v1790 = vpack.c.b16 %v1142, %v1134
    %v1791 = vpack.c.b16 %v1143, %v1135
    %v1792 = vpack.c.b16 %v1144, %v1136
    %v1793 = vpack.c.b16 %v1145, %v1137
    %v1794 = vpack.c.b16 %v1146, %v1138
    %v1795 = vpack.c.b16 %v1147, %v1139
    %v1796 = vpack.c.b16 %v1156, %v1148
    %v1797 = vpack.c.b16 %v1157, %v1149
    %v1798 = vpack.c.b16 %v1158, %v1150
    %v1799 = vpack.c.b16 %v1159, %v1151
    %v1800 = vpack.c.b16 %v1160, %v1152
    %v1801 = vpack.c.b16 %v1161, %v1153
    %v1802 = vpack.c.b16 %v1162, %v1154
    %v1803 = vpack.c.b16 %v1163, %v1155
    %v1804 = vpack.c.b16 %v1172, %v1164
    %v1805 = vpack.c.b16 %v1173, %v1165
    %v1806 = vpack.c.b16 %v1174, %v1166
    %v1807 = vpack.c.b16 %v1175, %v1167
    %v1808 = vpack.c.b16 %v1176, %v1168
    %v1809 = vpack.c.b16 %v1177, %v1169
    %v1810 = vpack.c.b16 %v1178, %v1170
    %v1811 = vpack.c.b16 %v1179, %v1171
    %v1812 = vpack.c.b16 %v1188, %v1180
    %v1813 = vpack.c.b16 %v1189, %v1181
    %v1814 = vpack.c.b16 %v1190, %v1182
    %v1815 = vpack.c.b16 %v1191, %v1183
    %v1816 = vpack.c.b16 %v1192, %v1184
    %v1817 = vpack.c.b16 %v1193, %v1185
    %v1818 = vpack.c.b16 %v1194, %v1186
    %v1819 = vpack.c.b16 %v1195, %v1187
    %v1820 = vpack.c.b16 %v1204, %v1196
    %v1821 = vpack.c.b16 %v1205, %v1197
    %v1822 = vpack.c.b16 %v1206, %v1198
    %v1823 = vpack.c.b16 %v1207, %v1199
    %v1824 = vpack.c.b16 %v1208, %v1200
    %v1825 = vpack.c.b16 %v1209, %v1201
    %v1826 = vpack.c.b16 %v1210, %v1202
    %v1827 = vpack.c.b16 %v1211, %v1203
    %v1828 = vpack.c.b16 %v1220, %v1212
    %v1829 = vpack.c.b16 %v1221, %v1213
    %v1830 = vpack.c.b16 %v1222, %v1214
    %v1831 = vpack.c.b16 %v1223, %v1215
    %v1832 = vpack.c.b16 %v1224, %v1216
    %v1833 = vpack.c.b16 %v1225, %v1217
    %v1834 = vpack.c.b16 %v1226, %v1218
    %v1835 = vpack.c.b16 %v1227, %v1219
    %v1836 = vpack.c.b16 %v1236, %v1228
    %v1837 = vpack.c.b16 %v1237, %v1229
    %v1838 = vpack.c.b16 %v1238, %v1230
    %v1839 = vpack.c.b16 %v1239, %v1231
    %v1840 = vpack.c.b16 %v1240, %v1232
    %v1841 = vpack.c.b16 %v1241, %v1233
    %v1842 = vpack.c.b16 %v1242, %v1234
    %v1843 = vpack.c.b16 %v1243, %v1235
    %v1844 = vpack.c.b16 %v1252, %v1244
    %v1845 = vpack.c.b16 %v1253, %v1245
    %v1846 = vpack.c.b16 %v1254, %v1246
    %v1847 = vpack.c.b16 %v1255, %v1247
    %v1848 = vpack.c.b16 %v1256, %v1248
    %v1849 = vpack.c.b16 %v1257, %v1249
    %v1850 = vpack.c.b16 %v1258, %v1250
    %v1851 = vpack.c.b16 %v1259, %v1251
    %v1852 = vpack.c.b16 %v1268, %v1260
    %v1853 = vpack.c.b16 %v1269, %v1261
    %v1854 = vpack.c.b16 %v1270, %v1262
    %v1855 = vpack.c.b16 %v1271, %v1263
    %v1856 = vpack.c.b16 %v1272, %v1264
    %v1857 = vpack.c.b16 %v1273, %v1265
    %v1858 = vpack.c.b16 %v1274, %v1266
    %v1859 = vpack.c.b16 %v1275, %v1267
    %v1860 = vpack.c.b16 %v1284, %v1276
    %v1861 = vpack.c.b16 %v1285, %v1277
    %v1862 = vpack.c.b16 %v1286, %v1278
    %v1863 = vpack.c.b16 %v1287, %v1279
    %v1864 = vpack.c.b16 %v1288, %v1280
    %v1865 = vpack.c.b16 %v1289, %v1281
    %v1866 = vpack.c.b16 %v1290, %v1282
    %v1867 = vpack.c.b16 %v1291, %v1283
    %v1868 = vpack.c.b16 %v1300, %v1292
    %v1869 = vpack.c.b16 %v1301, %v1293
    %v1870 = vpack.c.b16 %v1302, %v1294
    %v1871 = vpack.c.b16 %v1303, %v1295
    %v1872 = vpack.c.b16 %v1304, %v1296
    %v1873 = vpack.c.b16 %v1305, %v1297
    %v1874 = vpack.c.b16 %v1306, %v1298
    %v1875 = vpack.c.b16 %v1307, %v1299
    %v1876 = vpack.c.b16 %v1316, %v1308
    %v1877 = vpack.c.b16 %v1317, %v1309
    %v1878 = vpack.c.b16 %v1318, %v1310
    %v1879 = vpack.c.b16 %v1319, %v1311
    %v1880 = vpack.c.b16 %v1320, %v1312
    %v1881 = vpack.c.b16 %v1321, %v1313
    %v1882 = vpack.c.b16 %v1322, %v1314
    %v1883 = vpack.c.b16 %v1323, %v1315
    %v1884 = vpack.c.b16 %v1332, %v1324
    %v1885 = vpack.c.b16 %v1333, %v1325
    %v1886 = vpack.c.b16 %v1334, %v1326
    %v1887 = vpack.c.b16 %v1335, %v1327
    %v1888 = vpack.c.b16 %v1336, %v1328
    %v1889 = vpack.c.b16 %v1337, %v1329
    %v1890 = vpack.c.b16 %v1338, %v1330
    %v1891 = vpack.c.b16 %v1339, %v1331
    %v1892 = vpack.c.b16 %v1348, %v1340
    %v1893 = vpack.c.b16 %v1349, %v1341
    %v1894 = vpack.c.b16 %v1350, %v1342
    %v1895 = vpack.c.b16 %v1351, %v1343
    %v1896 = vpack.c.b16 %v1352, %v1344
    %v1897 = vpack.c.b16 %v1353, %v1345
    %v1898 = vpack.c.b16 %v1354, %v1346
    %v1899 = vpack.c.b16 %v1355, %v1347
    %v1900 = vpack.c.b16 %v1364, %v1356
    %v1901 = vpack.c.b16 %v1365, %v1357
    %v1902 = vpack.c.b16 %v1366, %v1358
    %v1903 = vpack.c.b16 %v1367, %v1359
    %v1904 = vpack.c.b16 %v1368, %v1360
    %v1905 = vpack.c.b16 %v1369, %v1361
    %v1906 = vpack.c.b16 %v1370, %v1362
    %v1907 = vpack.c.b16 %v1371, %v1363
    %v1908 = vpack.c.b16 %v1380, %v1372
    %v1909 = vpack.c.b16 %v1381, %v1373
    %v1910 = vpack.c.b16 %v1382, %v1374
    %v1911 = vpack.c.b16 %v1383, %v1375
    %v1912 = vpack.c.b16 %v1384, %v1376
    %v1913 = vpack.c.b16 %v1385, %v1377
    %v1914 = vpack.c.b16 %v1386, %v1378
    %v1915 = vpack.c.b16 %v1387, %v1379
    %v1916 = vpack.c.b16 %v1396, %v1388
    %v1917 = vpack.c.b16 %v1397, %v1389
    %v1918 = vpack.c.b16 %v1398, %v1390
    %v1919 = vpack.c.b16 %v1399, %v1391
    %v1920 = vpack.c.b16 %v1400, %v1392
    %v1921 = vpack.c.b16 %v1401, %v1393
    %v1922 = vpack.c.b16 %v1402, %v1394
    %v1923 = vpack.c.b16 %v1403, %v1395
    %v1924 = vpack.c.b16 %v1412, %v1404
    %v1925 = vpack.c.b16 %v1413, %v1405
    %v1926 = vpack.c.b16 %v1414, %v1406
    %v1927 = vpack.c.b16 %v1415, %v1407
    %v1928 = vpack.c.b16 %v1416, %v1408
    %v1929 = vpack.c.b16 %v1417, %v1409
    %v1930 = vpack.c.b16 %v1418, %v1410
    %v1931 = vpack.c.b16 %v1419, %v1411
    %v1932 = vpack.c.b16 %v1428, %v1420
    %v1933 = vpack.c.b16 %v1429, %v1421
    %v1934 = vpack.c.b16 %v1430, %v1422
    %v1935 = vpack.c.b16 %v1431, %v1423
    %v1936 = vpack.c.b16 %v1432, %v1424
    %v1937 = vpack.c.b16 %v1433, %v1425
    %v1938 = vpack.c.b16 %v1434, %v1426
    %v1939 = vpack.c.b16 %v1435, %v1427
    %v1940 = vpack.c.b16 %v1444, %v1436
    %v1941 = vpack.c.b16 %v1445, %v1437
    %v1942 = vpack.c.b16 %v1446, %v1438
    %v1943 = vpack.c.b16 %v1447, %v1439
    %v1944 = vpack.c.b16 %v1448, %v1440
    %v1945 = vpack.c.b16 %v1449, %v1441
    %v1946 = vpack.c.b16 %v1450, %v1442
    %v1947 = vpack.c.b16 %v1451, %v1443
    %v1948 = vpack.c.b16 %v1460, %v1452
    %v1949 = vpack.c.b16 %v1461, %v1453
    %v1950 = vpack.c.b16 %v1462, %v1454
    %v1951 = vpack.c.b16 %v1463, %v1455
    %v1952 = vpack.c.b16 %v1464, %v1456
    %v1953 = vpack.c.b16 %v1465, %v1457
    %v1954 = vpack.c.b16 %v1466, %v1458
    %v1955 = vpack.c.b16 %v1467, %v1459
    %v1956 = vpack.c.b16 %v1476, %v1468
    %v1957 = vpack.c.b16 %v1477, %v1469
    %v1958 = vpack.c.b16 %v1478, %v1470
    %v1959 = vpack.c.b16 %v1479, %v1471
    %v1960 = vpack.c.b16 %v1480, %v1472
    %v1961 = vpack.c.b16 %v1481, %v1473
    %v1962 = vpack.c.b16 %v1482, %v1474
    %v1963 = vpack.c.b16 %v1483, %v1475
    %v1964 = vpack.c.b16 %v1492, %v1484
    %v1965 = vpack.c.b16 %v1493, %v1485
    %v1966 = vpack.c.b16 %v1494, %v1486
    %v1967 = vpack.c.b16 %v1495, %v1487
    %v1968 = vpack.c.b16 %v1496, %v1488
    %v1969 = vpack.c.b16 %v1497, %v1489
    %v1970 = vpack.c.b16 %v1498, %v1490
    %v1971 = vpack.c.b16 %v1499, %v1491
    %v1972 = vpack.c.b16 %v1508, %v1500
    %v1973 = vpack.c.b16 %v1509, %v1501
    %v1974 = vpack.c.b16 %v1510, %v1502
    %v1975 = vpack.c.b16 %v1511, %v1503
    %v1976 = vpack.c.b16 %v1512, %v1504
    %v1977 = vpack.c.b16 %v1513, %v1505
    %v1978 = vpack.c.b16 %v1514, %v1506
    %v1979 = vpack.c.b16 %v1515, %v1507
    %v1980 = vpack.c.b16 %v1524, %v1516
    %v1981 = vpack.c.b16 %v1525, %v1517
    %v1982 = vpack.c.b16 %v1526, %v1518
    %v1983 = vpack.c.b16 %v1527, %v1519
    %v1984 = vpack.c.b16 %v1528, %v1520
    %v1985 = vpack.c.b16 %v1529, %v1521
    %v1986 = vpack.c.b16 %v1530, %v1522
    %v1987 = vpack.c.b16 %v1531, %v1523
    %v1988 = vpack.c.b16 %v1540, %v1532
    %v1989 = vpack.c.b16 %v1541, %v1533
    %v1990 = vpack.c.b16 %v1542, %v1534
    %v1991 = vpack.c.b16 %v1543, %v1535
    %v1992 = vpack.c.b16 %v1544, %v1536
    %v1993 = vpack.c.b16 %v1545, %v1537
    %v1994 = vpack.c.b16 %v1546, %v1538
    %v1995 = vpack.c.b16 %v1547, %v1539
    %v1996 = vpack.c.b16 %v1556, %v1548
    %v1997 = vpack.c.b16 %v1557, %v1549
    %v1998 = vpack.c.b16 %v1558, %v1550
    %v1999 = vpack.c.b16 %v1559, %v1551
    %v2000 = vpack.c.b16 %v1560, %v1552
    %v2001 = vpack.c.b16 %v1561, %v1553
    %v2002 = vpack.c.b16 %v1562, %v1554
    %v2003 = vpack.c.b16 %v1563, %v1555
    %v2004 = vpack.c.b16 %v1572, %v1564
    %v2005 = vpack.c.b16 %v1573, %v1565
    %v2006 = vpack.c.b16 %v1574, %v1566
    %v2007 = vpack.c.b16 %v1575, %v1567
    %v2008 = vpack.c.b16 %v1576, %v1568
    %v2009 = vpack.c.b16 %v1577, %v1569
    %v2010 = vpack.c.b16 %v1578, %v1570
    %v2011 = vpack.c.b16 %v1579, %v1571
    %v2012 = vpack.c.b16 %v1588, %v1580
    %v2013 = vpack.c.b16 %v1589, %v1581
    %v2014 = vpack.c.b16 %v1590, %v1582
    %v2015 = vpack.c.b16 %v1591, %v1583
    %v2016 = vpack.c.b16 %v1592, %v1584
    %v2017 = vpack.c.b16 %v1593, %v1585
    %v2018 = vpack.c.b16 %v1594, %v1586
    %v2019 = vpack.c.b16 %v1595, %v1587
    %v2020 = vpack.c.b16 %v1604, %v1596
    %v2021 = vpack.c.b16 %v1605, %v1597
    %v2022 = vpack.c.b16 %v1606, %v1598
    %v2023 = vpack.c.b16 %v1607, %v1599
    %v2024 = vpack.c.b16 %v1608, %v1600
    %v2025 = vpack.c.b16 %v1609, %v1601
    %v2026 = vpack.c.b16 %v1610, %v1602
    %v2027 = vpack.c.b16 %v1611, %v1603
    %v2028 = vpack.c.b16 %v1620, %v1612
    %v2029 = vpack.c.b16 %v1621, %v1613
    %v2030 = vpack.c.b16 %v1622, %v1614
    %v2031 = vpack.c.b16 %v1623, %v1615
    %v2032 = vpack.c.b16 %v1624, %v1616
    %v2033 = vpack.c.b16 %v1625, %v1617
    %v2034 = vpack.c.b16 %v1626, %v1618
    %v2035 = vpack.c.b16 %v1627, %v1619
    %v2036 = vpack.c.b16 %v1636, %v1628
    %v2037 = vpack.c.b16 %v1637, %v1629
    %v2038 = vpack.c.b16 %v1638, %v1630
    %v2039 = vpack.c.b16 %v1639, %v1631
    %v2040 = vpack.c.b16 %v1640, %v1632
    %v2041 = vpack.c.b16 %v1641, %v1633
    %v2042 = vpack.c.b16 %v1642, %v1634
    %v2043 = vpack.c.b16 %v1643, %v1635
    %v2044 = vpack.c.b16 %v1652, %v1644
    %v2045 = vpack.c.b16 %v1653, %v1645
    %v2046 = vpack.c.b16 %v1654, %v1646
    %v2047 = vpack.c.b16 %v1655, %v1647
    %v2048 = vpack.c.b16 %v1656, %v1648
    %v2049 = vpack.c.b16 %v1657, %v1649
    %v2050 = vpack.c.b16 %v1658, %v1650
    %v2051 = vpack.c.b16 %v1659, %v1651
    %v2052 = vpack.c.b16 %v1668, %v1660
    %v2053 = vpack.c.b16 %v1669, %v1661
    %v2054 = vpack.c.b16 %v1670, %v1662
    %v2055 = vpack.c.b16 %v1671, %v1663
    %v2056 = vpack.c.b16 %v1672, %v1664
    %v2057 = vpack.c.b16 %v1673, %v1665
    %v2058 = vpack.c.b16 %v1674, %v1666
    %v2059 = vpack.c.b16 %v1675, %v1667
    %2444 = vmatprep.subr.bf16.mxu0 %v1677
    %2445 = vmatpush1.bf16.msra.mxu0 %v1676
    %2446 = vmatprep.subr.bf16.mxu0 %v1685
    %2447 = vmatpush1.bf16.msra.mxu0 %v1684
    %2448 = vmatprep.subr.bf16.mxu0 %v1693
    %2449 = vmatpush1.bf16.msra.mxu0 %v1692
    %2450 = vmatprep.subr.bf16.mxu0 %v1701
    %2451 = vmatpush1.bf16.msra.mxu0 %v1700
    %2452 = vmatprep.subr.bf16.mxu0 %v1709
    %2453 = vmatpush1.bf16.msra.mxu0 %v1708
    %2454 = vmatprep.subr.bf16.mxu0 %v1717
    %2455 = vmatpush1.bf16.msra.mxu0 %v1716
    %2456 = vmatprep.subr.bf16.mxu0 %v1725
    %2457 = vmatpush1.bf16.msra.mxu0 %v1724
    %2458 = vmatprep.subr.bf16.mxu0 %v1733
    %2459 = vmatpush1.bf16.msra.mxu0 %v1732
    %2460 = vmatprep.subr.bf16.mxu0 %v1741
    %2461 = vmatpush1.bf16.msra.mxu0 %v1740
    %2462 = vmatprep.subr.bf16.mxu0 %v1749
    %2463 = vmatpush1.bf16.msra.mxu0 %v1748
    %2464 = vmatprep.subr.bf16.mxu0 %v1757
    %2465 = vmatpush1.bf16.msra.mxu0 %v1756
    %2466 = vmatprep.subr.bf16.mxu0 %v1765
    %2467 = vmatpush1.bf16.msra.mxu0 %v1764
    %2468 = vmatprep.subr.bf16.mxu0 %v1773
    %2469 = vmatpush1.bf16.msra.mxu0 %v1772
    %2470 = vmatprep.subr.bf16.mxu0 %v1781
    %2471 = vmatpush1.bf16.msra.mxu0 %v1780
    %2472 = vmatprep.subr.bf16.mxu0 %v1789
    %2473 = vmatpush1.bf16.msra.mxu0 %v1788
    %2474 = vmatprep.subr.bf16.mxu0 %v1797
    %2475 = vmatpush1.bf16.msra.mxu0 %v1796
    %2476 = vmatprep.mubr.bf16.mxu0 %v513
    %2477 = vmatmul.mubr.bf16.gmra.mrb[0].mxu0 %v512
    %v2478 = vpop.f32.mrb[0].mxu0
    %v2479 = vadd.f32 %v466, %v2478
    %v2480 = vpop.f32.mrb[0].mxu0
    %v2481 = vadd.f32 %v470, %v2480
    %v2482 = vpop.f32.mrb[0].mxu0
    %v2483 = vpop.f32.mrb[0].mxu0
    %2484 = vdwg.mxu0
    %2485 = vmatprep.subr.bf16.mxu0 %v1805
    %2486 = vmatpush1.bf16.msra.mxu0 %v1804
    %2487 = vmatprep.subr.bf16.mxu0 %v1813
    %2488 = vmatpush1.bf16.msra.mxu0 %v1812
    %2489 = vmatprep.subr.bf16.mxu0 %v1821
    %2490 = vmatpush1.bf16.msra.mxu0 %v1820
    %2491 = vmatprep.subr.bf16.mxu0 %v1829
    %2492 = vmatpush1.bf16.msra.mxu0 %v1828
    %2493 = vmatprep.subr.bf16.mxu0 %v1837
    %2494 = vmatpush1.bf16.msra.mxu0 %v1836
    %2495 = vmatprep.subr.bf16.mxu0 %v1845
    %2496 = vmatpush1.bf16.msra.mxu0 %v1844
    %2497 = vmatprep.subr.bf16.mxu0 %v1853
    %2498 = vmatpush1.bf16.msra.mxu0 %v1852
    %2499 = vmatprep.subr.bf16.mxu0 %v1861
    %2500 = vmatpush1.bf16.msra.mxu0 %v1860
    %2501 = vmatprep.subr.bf16.mxu0 %v1869
    %2502 = vmatpush1.bf16.msra.mxu0 %v1868
    %2503 = vmatprep.subr.bf16.mxu0 %v1877
    %2504 = vmatpush1.bf16.msra.mxu0 %v1876
    %2505 = vmatprep.subr.bf16.mxu0 %v1885
    %2506 = vmatpush1.bf16.msra.mxu0 %v1884
    %2507 = vmatprep.subr.bf16.mxu0 %v1893
    %2508 = vmatpush1.bf16.msra.mxu0 %v1892
    %2509 = vmatprep.subr.bf16.mxu0 %v1901
    %2510 = vmatpush1.bf16.msra.mxu0 %v1900
    %2511 = vmatprep.subr.bf16.mxu0 %v1909
    %2512 = vmatpush1.bf16.msra.mxu0 %v1908
    %2513 = vmatprep.subr.bf16.mxu0 %v1917
    %2514 = vmatpush1.bf16.msra.mxu0 %v1916
    %2515 = vmatprep.subr.bf16.mxu0 %v1925
    %2516 = vmatpush1.bf16.msra.mxu0 %v1924
    %2517 = vmatprep.mubr.bf16.mxu0 %v515
    %2518 = vmatmul.mubr.bf16.gmra.mrb[0].mxu0 %v514
    %v2519 = vpop.f32.mrb[0].mxu0
    %v2520 = vadd.f32 %v2479, %v2519
    %v2521 = vpop.f32.mrb[0].mxu0
    %v2522 = vadd.f32 %v2481, %v2521
    %v2523 = vpop.f32.mrb[0].mxu0
    %v2524 = vpop.f32.mrb[0].mxu0
    %2525 = vdwg.mxu0
    %2526 = vmatprep.subr.bf16.mxu0 %v1933
    %2527 = vmatpush1.bf16.msra.mxu0 %v1932
    %2528 = vmatprep.subr.bf16.mxu0 %v1941
    %2529 = vmatpush1.bf16.msra.mxu0 %v1940
    %2530 = vmatprep.subr.bf16.mxu0 %v1949
    %2531 = vmatpush1.bf16.msra.mxu0 %v1948
    %2532 = vmatprep.subr.bf16.mxu0 %v1957
    %2533 = vmatpush1.bf16.msra.mxu0 %v1956
    %2534 = vmatprep.subr.bf16.mxu0 %v1965
    %2535 = vmatpush1.bf16.msra.mxu0 %v1964
    %2536 = vmatprep.subr.bf16.mxu0 %v1973
    %2537 = vmatpush1.bf16.msra.mxu0 %v1972
    %2538 = vmatprep.subr.bf16.mxu0 %v1981
    %2539 = vmatpush1.bf16.msra.mxu0 %v1980
    %2540 = vmatprep.subr.bf16.mxu0 %v1989
    %2541 = vmatpush1.bf16.msra.mxu0 %v1988
    %2542 = vmatprep.subr.bf16.mxu0 %v1997
    %2543 = vmatpush1.bf16.msra.mxu0 %v1996
    %2544 = vmatprep.subr.bf16.mxu0 %v2005
    %2545 = vmatpush1.bf16.msra.mxu0 %v2004
    %2546 = vmatprep.subr.bf16.mxu0 %v2013
    %2547 = vmatpush1.bf16.msra.mxu0 %v2012
    %2548 = vmatprep.subr.bf16.mxu0 %v2021
    %2549 = vmatpush1.bf16.msra.mxu0 %v2020
    %2550 = vmatprep.subr.bf16.mxu0 %v2029
    %2551 = vmatpush1.bf16.msra.mxu0 %v2028
    %2552 = vmatprep.subr.bf16.mxu0 %v2037
    %2553 = vmatpush1.bf16.msra.mxu0 %v2036
    %2554 = vmatprep.subr.bf16.mxu0 %v2045
    %2555 = vmatpush1.bf16.msra.mxu0 %v2044
    %2556 = vmatprep.subr.bf16.mxu0 %v2053
    %2557 = vmatpush1.bf16.msra.mxu0 %v2052
    %2558 = vmatprep.mubr.bf16.mxu0 %v517
    %2559 = vmatmul.mubr.bf16.gmra.mrb[0].mxu0 %v516
    %v2560 = vpop.f32.mrb[0].mxu0
    %v2561 = vadd.f32 %v2520, %v2560
    %v2562 = vpop.f32.mrb[0].mxu0
    %v2563 = vadd.f32 %v2522, %v2562
    %v2564 = vpop.f32.mrb[0].mxu0
    %v2565 = vpop.f32.mrb[0].mxu0
    %2566 = vdwg.mxu0
    %2567 = vmatprep.subr.bf16.mxu0 %v1679
    %2568 = vmatpush1.bf16.msra.mxu0 %v1678
    %2569 = vmatprep.subr.bf16.mxu0 %v1687
    %2570 = vmatpush1.bf16.msra.mxu0 %v1686
    %2571 = vmatprep.subr.bf16.mxu0 %v1695
    %2572 = vmatpush1.bf16.msra.mxu0 %v1694
    %2573 = vmatprep.subr.bf16.mxu0 %v1703
    %2574 = vmatpush1.bf16.msra.mxu0 %v1702
    %2575 = vmatprep.subr.bf16.mxu0 %v1711
    %2576 = vmatpush1.bf16.msra.mxu0 %v1710
    %2577 = vmatprep.subr.bf16.mxu0 %v1719
    %2578 = vmatpush1.bf16.msra.mxu0 %v1718
    %2579 = vmatprep.subr.bf16.mxu0 %v1727
    %2580 = vmatpush1.bf16.msra.mxu0 %v1726
    %2581 = vmatprep.subr.bf16.mxu0 %v1735
    %2582 = vmatpush1.bf16.msra.mxu0 %v1734
    %2583 = vmatprep.subr.bf16.mxu0 %v1743
    %2584 = vmatpush1.bf16.msra.mxu0 %v1742
    %2585 = vmatprep.subr.bf16.mxu0 %v1751
    %2586 = vmatpush1.bf16.msra.mxu0 %v1750
    %2587 = vmatprep.subr.bf16.mxu0 %v1759
    %2588 = vmatpush1.bf16.msra.mxu0 %v1758
    %2589 = vmatprep.subr.bf16.mxu0 %v1767
    %2590 = vmatpush1.bf16.msra.mxu0 %v1766
    %2591 = vmatprep.subr.bf16.mxu0 %v1775
    %2592 = vmatpush1.bf16.msra.mxu0 %v1774
    %2593 = vmatprep.subr.bf16.mxu0 %v1783
    %2594 = vmatpush1.bf16.msra.mxu0 %v1782
    %2595 = vmatprep.subr.bf16.mxu0 %v1791
    %2596 = vmatpush1.bf16.msra.mxu0 %v1790
    %2597 = vmatprep.subr.bf16.mxu0 %v1799
    %2598 = vmatpush1.bf16.msra.mxu0 %v1798
    %2599 = vmatprep.mubr.bf16.mxu0 %v513
    %2600 = vmatmul.mubr.bf16.gmra.mrb[0].mxu0 %v512
    %v2601 = vpop.f32.mrb[0].mxu0
    %v2602 = vadd.f32 %v474, %v2601
    %v2603 = vpop.f32.mrb[0].mxu0
    %v2604 = vadd.f32 %v478, %v2603
    %v2605 = vpop.f32.mrb[0].mxu0
    %v2606 = vpop.f32.mrb[0].mxu0
    %2607 = vdwg.mxu0
    %2608 = vmatprep.subr.bf16.mxu0 %v1807
    %2609 = vmatpush1.bf16.msra.mxu0 %v1806
    %2610 = vmatprep.subr.bf16.mxu0 %v1815
    %2611 = vmatpush1.bf16.msra.mxu0 %v1814
    %2612 = vmatprep.subr.bf16.mxu0 %v1823
    %2613 = vmatpush1.bf16.msra.mxu0 %v1822
    %2614 = vmatprep.subr.bf16.mxu0 %v1831
    %2615 = vmatpush1.bf16.msra.mxu0 %v1830
    %2616 = vmatprep.subr.bf16.mxu0 %v1839
    %2617 = vmatpush1.bf16.msra.mxu0 %v1838
    %2618 = vmatprep.subr.bf16.mxu0 %v1847
    %2619 = vmatpush1.bf16.msra.mxu0 %v1846
    %2620 = vmatprep.subr.bf16.mxu0 %v1855
    %2621 = vmatpush1.bf16.msra.mxu0 %v1854
    %2622 = vmatprep.subr.bf16.mxu0 %v1863
    %2623 = vmatpush1.bf16.msra.mxu0 %v1862
    %2624 = vmatprep.subr.bf16.mxu0 %v1871
    %2625 = vmatpush1.bf16.msra.mxu0 %v1870
    %2626 = vmatprep.subr.bf16.mxu0 %v1879
    %2627 = vmatpush1.bf16.msra.mxu0 %v1878
    %2628 = vmatprep.subr.bf16.mxu0 %v1887
    %2629 = vmatpush1.bf16.msra.mxu0 %v1886
    %2630 = vmatprep.subr.bf16.mxu0 %v1895
    %2631 = vmatpush1.bf16.msra.mxu0 %v1894
    %2632 = vmatprep.subr.bf16.mxu0 %v1903
    %2633 = vmatpush1.bf16.msra.mxu0 %v1902
    %2634 = vmatprep.subr.bf16.mxu0 %v1911
    %2635 = vmatpush1.bf16.msra.mxu0 %v1910
    %2636 = vmatprep.subr.bf16.mxu0 %v1919
    %2637 = vmatpush1.bf16.msra.mxu0 %v1918
    %2638 = vmatprep.subr.bf16.mxu0 %v1927
    %2639 = vmatpush1.bf16.msra.mxu0 %v1926
    %2640 = vmatprep.mubr.bf16.mxu0 %v515
    %2641 = vmatmul.mubr.bf16.gmra.mrb[0].mxu0 %v514
    %v2642 = vpop.f32.mrb[0].mxu0
    %v2643 = vadd.f32 %v2602, %v2642
    %v2644 = vpop.f32.mrb[0].mxu0
    %v2645 = vadd.f32 %v2604, %v2644
    %v2646 = vpop.f32.mrb[0].mxu0
    %v2647 = vpop.f32.mrb[0].mxu0
    %2648 = vdwg.mxu0
    %2649 = vmatprep.subr.bf16.mxu0 %v1935
    %2650 = vmatpush1.bf16.msra.mxu0 %v1934
    %2651 = vmatprep.subr.bf16.mxu0 %v1943
    %2652 = vmatpush1.bf16.msra.mxu0 %v1942
    %2653 = vmatprep.subr.bf16.mxu0 %v1951
    %2654 = vmatpush1.bf16.msra.mxu0 %v1950
    %2655 = vmatprep.subr.bf16.mxu0 %v1959
    %2656 = vmatpush1.bf16.msra.mxu0 %v1958
    %2657 = vmatprep.subr.bf16.mxu0 %v1967
    %2658 = vmatpush1.bf16.msra.mxu0 %v1966
    %2659 = vmatprep.subr.bf16.mxu0 %v1975
    %2660 = vmatpush1.bf16.msra.mxu0 %v1974
    %2661 = vmatprep.subr.bf16.mxu0 %v1983
    %2662 = vmatpush1.bf16.msra.mxu0 %v1982
    %2663 = vmatprep.subr.bf16.mxu0 %v1991
    %2664 = vmatpush1.bf16.msra.mxu0 %v1990
    %2665 = vmatprep.subr.bf16.mxu0 %v1999
    %2666 = vmatpush1.bf16.msra.mxu0 %v1998
    %2667 = vmatprep.subr.bf16.mxu0 %v2007
    %2668 = vmatpush1.bf16.msra.mxu0 %v2006
    %2669 = vmatprep.subr.bf16.mxu0 %v2015
    %2670 = vmatpush1.bf16.msra.mxu0 %v2014
    %2671 = vmatprep.subr.bf16.mxu0 %v2023
    %2672 = vmatpush1.bf16.msra.mxu0 %v2022
    %2673 = vmatprep.subr.bf16.mxu0 %v2031
    %2674 = vmatpush1.bf16.msra.mxu0 %v2030
    %2675 = vmatprep.subr.bf16.mxu0 %v2039
    %2676 = vmatpush1.bf16.msra.mxu0 %v2038
    %2677 = vmatprep.subr.bf16.mxu0 %v2047
    %2678 = vmatpush1.bf16.msra.mxu0 %v2046
    %2679 = vmatprep.subr.bf16.mxu0 %v2055
    %2680 = vmatpush1.bf16.msra.mxu0 %v2054
    %2681 = vmatprep.mubr.bf16.mxu0 %v517
    %2682 = vmatmul.mubr.bf16.gmra.mrb[0].mxu0 %v516
    %v2683 = vpop.f32.mrb[0].mxu0
    %v2684 = vadd.f32 %v2643, %v2683
    %v2685 = vpop.f32.mrb[0].mxu0
    %v2686 = vadd.f32 %v2645, %v2685
    %v2687 = vpop.f32.mrb[0].mxu0
    %v2688 = vpop.f32.mrb[0].mxu0
    %2689 = vdwg.mxu0
    %2690 = vmatprep.subr.bf16.mxu0 %v1681
    %2691 = vmatpush1.bf16.msra.mxu0 %v1680
    %2692 = vmatprep.subr.bf16.mxu0 %v1689
    %2693 = vmatpush1.bf16.msra.mxu0 %v1688
    %2694 = vmatprep.subr.bf16.mxu0 %v1697
    %2695 = vmatpush1.bf16.msra.mxu0 %v1696
    %2696 = vmatprep.subr.bf16.mxu0 %v1705
    %2697 = vmatpush1.bf16.msra.mxu0 %v1704
    %2698 = vmatprep.subr.bf16.mxu0 %v1713
    %2699 = vmatpush1.bf16.msra.mxu0 %v1712
    %2700 = vmatprep.subr.bf16.mxu0 %v1721
    %2701 = vmatpush1.bf16.msra.mxu0 %v1720
    %2702 = vmatprep.subr.bf16.mxu0 %v1729
    %2703 = vmatpush1.bf16.msra.mxu0 %v1728
    %2704 = vmatprep.subr.bf16.mxu0 %v1737
    %2705 = vmatpush1.bf16.msra.mxu0 %v1736
    %2706 = vmatprep.subr.bf16.mxu0 %v1745
    %2707 = vmatpush1.bf16.msra.mxu0 %v1744
    %2708 = vmatprep.subr.bf16.mxu0 %v1753
    %2709 = vmatpush1.bf16.msra.mxu0 %v1752
    %2710 = vmatprep.subr.bf16.mxu0 %v1761
    %2711 = vmatpush1.bf16.msra.mxu0 %v1760
    %2712 = vmatprep.subr.bf16.mxu0 %v1769
    %2713 = vmatpush1.bf16.msra.mxu0 %v1768
    %2714 = vmatprep.subr.bf16.mxu0 %v1777
    %2715 = vmatpush1.bf16.msra.mxu0 %v1776
    %2716 = vmatprep.subr.bf16.mxu0 %v1785
    %2717 = vmatpush1.bf16.msra.mxu0 %v1784
    %2718 = vmatprep.subr.bf16.mxu0 %v1793
    %2719 = vmatpush1.bf16.msra.mxu0 %v1792
    %2720 = vmatprep.subr.bf16.mxu0 %v1801
    %2721 = vmatpush1.bf16.msra.mxu0 %v1800
    %2722 = vmatprep.mubr.bf16.mxu0 %v513
    %2723 = vmatmul.mubr.bf16.gmra.mrb[0].mxu0 %v512
    %v2724 = vpop.f32.mrb[0].mxu0
    %v2725 = vadd.f32 %v482, %v2724
    %v2726 = vpop.f32.mrb[0].mxu0
    %v2727 = vadd.f32 %v486, %v2726
    %v2728 = vpop.f32.mrb[0].mxu0
    %v2729 = vpop.f32.mrb[0].mxu0
    %2730 = vdwg.mxu0
    %2731 = vmatprep.subr.bf16.mxu0 %v1809
    %2732 = vmatpush1.bf16.msra.mxu0 %v1808
    %2733 = vmatprep.subr.bf16.mxu0 %v1817
    %2734 = vmatpush1.bf16.msra.mxu0 %v1816
    %2735 = vmatprep.subr.bf16.mxu0 %v1825
    %2736 = vmatpush1.bf16.msra.mxu0 %v1824
    %2737 = vmatprep.subr.bf16.mxu0 %v1833
    %2738 = vmatpush1.bf16.msra.mxu0 %v1832
    %2739 = vmatprep.subr.bf16.mxu0 %v1841
    %2740 = vmatpush1.bf16.msra.mxu0 %v1840
    %2741 = vmatprep.subr.bf16.mxu0 %v1849
    %2742 = vmatpush1.bf16.msra.mxu0 %v1848
    %2743 = vmatprep.subr.bf16.mxu0 %v1857
    %2744 = vmatpush1.bf16.msra.mxu0 %v1856
    %2745 = vmatprep.subr.bf16.mxu0 %v1865
    %2746 = vmatpush1.bf16.msra.mxu0 %v1864
    %2747 = vmatprep.subr.bf16.mxu0 %v1873
    %2748 = vmatpush1.bf16.msra.mxu0 %v1872
    %2749 = vmatprep.subr.bf16.mxu0 %v1881
    %2750 = vmatpush1.bf16.msra.mxu0 %v1880
    %2751 = vmatprep.subr.bf16.mxu0 %v1889
    %2752 = vmatpush1.bf16.msra.mxu0 %v1888
    %2753 = vmatprep.subr.bf16.mxu0 %v1897
    %2754 = vmatpush1.bf16.msra.mxu0 %v1896
    %2755 = vmatprep.subr.bf16.mxu0 %v1905
    %2756 = vmatpush1.bf16.msra.mxu0 %v1904
    %2757 = vmatprep.subr.bf16.mxu0 %v1913
    %2758 = vmatpush1.bf16.msra.mxu0 %v1912
    %2759 = vmatprep.subr.bf16.mxu0 %v1921
    %2760 = vmatpush1.bf16.msra.mxu0 %v1920
    %2761 = vmatprep.subr.bf16.mxu0 %v1929
    %2762 = vmatpush1.bf16.msra.mxu0 %v1928
    %2763 = vmatprep.mubr.bf16.mxu0 %v515
    %2764 = vmatmul.mubr.bf16.gmra.mrb[0].mxu0 %v514
    %v2765 = vpop.f32.mrb[0].mxu0
    %v2766 = vadd.f32 %v2725, %v2765
    %v2767 = vpop.f32.mrb[0].mxu0
    %v2768 = vadd.f32 %v2727, %v2767
    %v2769 = vpop.f32.mrb[0].mxu0
    %v2770 = vpop.f32.mrb[0].mxu0
    %2771 = vdwg.mxu0
    %2772 = vmatprep.subr.bf16.mxu0 %v1937
    %2773 = vmatpush1.bf16.msra.mxu0 %v1936
    %2774 = vmatprep.subr.bf16.mxu0 %v1945
    %2775 = vmatpush1.bf16.msra.mxu0 %v1944
    %2776 = vmatprep.subr.bf16.mxu0 %v1953
    %2777 = vmatpush1.bf16.msra.mxu0 %v1952
    %2778 = vmatprep.subr.bf16.mxu0 %v1961
    %2779 = vmatpush1.bf16.msra.mxu0 %v1960
    %2780 = vmatprep.subr.bf16.mxu0 %v1969
    %2781 = vmatpush1.bf16.msra.mxu0 %v1968
    %2782 = vmatprep.subr.bf16.mxu0 %v1977
    %2783 = vmatpush1.bf16.msra.mxu0 %v1976
    %2784 = vmatprep.subr.bf16.mxu0 %v1985
    %2785 = vmatpush1.bf16.msra.mxu0 %v1984
    %2786 = vmatprep.subr.bf16.mxu0 %v1993
    %2787 = vmatpush1.bf16.msra.mxu0 %v1992
    %2788 = vmatprep.subr.bf16.mxu0 %v2001
    %2789 = vmatpush1.bf16.msra.mxu0 %v2000
    %2790 = vmatprep.subr.bf16.mxu0 %v2009
    %2791 = vmatpush1.bf16.msra.mxu0 %v2008
    %2792 = vmatprep.subr.bf16.mxu0 %v2017
    %2793 = vmatpush1.bf16.msra.mxu0 %v2016
    %2794 = vmatprep.subr.bf16.mxu0 %v2025
    %2795 = vmatpush1.bf16.msra.mxu0 %v2024
    %2796 = vmatprep.subr.bf16.mxu0 %v2033
    %2797 = vmatpush1.bf16.msra.mxu0 %v2032
    %2798 = vmatprep.subr.bf16.mxu0 %v2041
    %2799 = vmatpush1.bf16.msra.mxu0 %v2040
    %2800 = vmatprep.subr.bf16.mxu0 %v2049
    %2801 = vmatpush1.bf16.msra.mxu0 %v2048
    %2802 = vmatprep.subr.bf16.mxu0 %v2057
    %2803 = vmatpush1.bf16.msra.mxu0 %v2056
    %2804 = vmatprep.mubr.bf16.mxu0 %v517
    %2805 = vmatmul.mubr.bf16.gmra.mrb[0].mxu0 %v516
    %v2806 = vpop.f32.mrb[0].mxu0
    %v2807 = vadd.f32 %v2766, %v2806
    %v2808 = vpop.f32.mrb[0].mxu0
    %v2809 = vadd.f32 %v2768, %v2808
    %v2810 = vpop.f32.mrb[0].mxu0
    %v2811 = vpop.f32.mrb[0].mxu0
    %2812 = vdwg.mxu0
    %2813 = vmatprep.subr.bf16.mxu0 %v1683
    %2814 = vmatpush1.bf16.msra.mxu0 %v1682
    %2815 = vmatprep.subr.bf16.mxu0 %v1691
    %2816 = vmatpush1.bf16.msra.mxu0 %v1690
    %2817 = vmatprep.subr.bf16.mxu0 %v1699
    %2818 = vmatpush1.bf16.msra.mxu0 %v1698
    %2819 = vmatprep.subr.bf16.mxu0 %v1707
    %2820 = vmatpush1.bf16.msra.mxu0 %v1706
    %2821 = vmatprep.subr.bf16.mxu0 %v1715
    %2822 = vmatpush1.bf16.msra.mxu0 %v1714
    %2823 = vmatprep.subr.bf16.mxu0 %v1723
    %2824 = vmatpush1.bf16.msra.mxu0 %v1722
    %2825 = vmatprep.subr.bf16.mxu0 %v1731
    %2826 = vmatpush1.bf16.msra.mxu0 %v1730
    %2827 = vmatprep.subr.bf16.mxu0 %v1739
    %2828 = vmatpush1.bf16.msra.mxu0 %v1738
    %2829 = vmatprep.subr.bf16.mxu0 %v1747
    %2830 = vmatpush1.bf16.msra.mxu0 %v1746
    %2831 = vmatprep.subr.bf16.mxu0 %v1755
    %2832 = vmatpush1.bf16.msra.mxu0 %v1754
    %2833 = vmatprep.subr.bf16.mxu0 %v1763
    %2834 = vmatpush1.bf16.msra.mxu0 %v1762
    %2835 = vmatprep.subr.bf16.mxu0 %v1771
    %2836 = vmatpush1.bf16.msra.mxu0 %v1770
    %2837 = vmatprep.subr.bf16.mxu0 %v1779
    %2838 = vmatpush1.bf16.msra.mxu0 %v1778
    %2839 = vmatprep.subr.bf16.mxu0 %v1787
    %2840 = vmatpush1.bf16.msra.mxu0 %v1786
    %2841 = vmatprep.subr.bf16.mxu0 %v1795
    %2842 = vmatpush1.bf16.msra.mxu0 %v1794
    %2843 = vmatprep.subr.bf16.mxu0 %v1803
    %2844 = vmatpush1.bf16.msra.mxu0 %v1802
    %2845 = vmatprep.mubr.bf16.mxu0 %v513
    %2846 = vmatmul.mubr.bf16.gmra.mrb[0].mxu0 %v512
    %v2847 = vpop.f32.mrb[0].mxu0
    %v2848 = vadd.f32 %v490, %v2847
    %v2849 = vpop.f32.mrb[0].mxu0
    %v2850 = vadd.f32 %v494, %v2849
    %v2851 = vpop.f32.mrb[0].mxu0
    %v2852 = vpop.f32.mrb[0].mxu0
    %2853 = vdwg.mxu0
    %2854 = vmatprep.subr.bf16.mxu0 %v1811
    %2855 = vmatpush1.bf16.msra.mxu0 %v1810
    %2856 = vmatprep.subr.bf16.mxu0 %v1819
    %2857 = vmatpush1.bf16.msra.mxu0 %v1818
    %2858 = vmatprep.subr.bf16.mxu0 %v1827
    %2859 = vmatpush1.bf16.msra.mxu0 %v1826
    %2860 = vmatprep.subr.bf16.mxu0 %v1835
    %2861 = vmatpush1.bf16.msra.mxu0 %v1834
    %2862 = vmatprep.subr.bf16.mxu0 %v1843
    %2863 = vmatpush1.bf16.msra.mxu0 %v1842
    %2864 = vmatprep.subr.bf16.mxu0 %v1851
    %2865 = vmatpush1.bf16.msra.mxu0 %v1850
    %2866 = vmatprep.subr.bf16.mxu0 %v1859
    %2867 = vmatpush1.bf16.msra.mxu0 %v1858
    %2868 = vmatprep.subr.bf16.mxu0 %v1867
    %2869 = vmatpush1.bf16.msra.mxu0 %v1866
    %2870 = vmatprep.subr.bf16.mxu0 %v1875
    %2871 = vmatpush1.bf16.msra.mxu0 %v1874
    %2872 = vmatprep.subr.bf16.mxu0 %v1883
    %2873 = vmatpush1.bf16.msra.mxu0 %v1882
    %2874 = vmatprep.subr.bf16.mxu0 %v1891
    %2875 = vmatpush1.bf16.msra.mxu0 %v1890
    %2876 = vmatprep.subr.bf16.mxu0 %v1899
    %2877 = vmatpush1.bf16.msra.mxu0 %v1898
    %2878 = vmatprep.subr.bf16.mxu0 %v1907
    %2879 = vmatpush1.bf16.msra.mxu0 %v1906
    %2880 = vmatprep.subr.bf16.mxu0 %v1915
    %2881 = vmatpush1.bf16.msra.mxu0 %v1914
    %2882 = vmatprep.subr.bf16.mxu0 %v1923
    %2883 = vmatpush1.bf16.msra.mxu0 %v1922
    %2884 = vmatprep.subr.bf16.mxu0 %v1931
    %2885 = vmatpush1.bf16.msra.mxu0 %v1930
    %2886 = vmatprep.mubr.bf16.mxu0 %v515
    %2887 = vmatmul.mubr.bf16.gmra.mrb[0].mxu0 %v514
    %v2888 = vpop.f32.mrb[0].mxu0
    %v2889 = vadd.f32 %v2848, %v2888
    %v2890 = vpop.f32.mrb[0].mxu0
    %v2891 = vadd.f32 %v2850, %v2890
    %v2892 = vpop.f32.mrb[0].mxu0
    %v2893 = vpop.f32.mrb[0].mxu0
    %2894 = vdwg.mxu0
    %2895 = vmatprep.subr.bf16.mxu0 %v1939
    %2896 = vmatpush1.bf16.msra.mxu0 %v1938
    %2897 = vmatprep.subr.bf16.mxu0 %v1947
    %2898 = vmatpush1.bf16.msra.mxu0 %v1946
    %2899 = vmatprep.subr.bf16.mxu0 %v1955
    %2900 = vmatpush1.bf16.msra.mxu0 %v1954
    %2901 = vmatprep.subr.bf16.mxu0 %v1963
    %2902 = vmatpush1.bf16.msra.mxu0 %v1962
    %2903 = vmatprep.subr.bf16.mxu0 %v1971
    %2904 = vmatpush1.bf16.msra.mxu0 %v1970
    %2905 = vmatprep.subr.bf16.mxu0 %v1979
    %2906 = vmatpush1.bf16.msra.mxu0 %v1978
    %2907 = vmatprep.subr.bf16.mxu0 %v1987
    %2908 = vmatpush1.bf16.msra.mxu0 %v1986
    %2909 = vmatprep.subr.bf16.mxu0 %v1995
    %2910 = vmatpush1.bf16.msra.mxu0 %v1994
    %2911 = vmatprep.subr.bf16.mxu0 %v2003
    %2912 = vmatpush1.bf16.msra.mxu0 %v2002
    %2913 = vmatprep.subr.bf16.mxu0 %v2011
    %2914 = vmatpush1.bf16.msra.mxu0 %v2010
    %2915 = vmatprep.subr.bf16.mxu0 %v2019
    %2916 = vmatpush1.bf16.msra.mxu0 %v2018
    %2917 = vmatprep.subr.bf16.mxu0 %v2027
    %2918 = vmatpush1.bf16.msra.mxu0 %v2026
    %2919 = vmatprep.subr.bf16.mxu0 %v2035
    %2920 = vmatpush1.bf16.msra.mxu0 %v2034
    %2921 = vmatprep.subr.bf16.mxu0 %v2043
    %2922 = vmatpush1.bf16.msra.mxu0 %v2042
    %2923 = vmatprep.subr.bf16.mxu0 %v2051
    %2924 = vmatpush1.bf16.msra.mxu0 %v2050
    %2925 = vmatprep.subr.bf16.mxu0 %v2059
    %2926 = vmatpush1.bf16.msra.mxu0 %v2058
    %2927 = vmatprep.mubr.bf16.mxu0 %v517
    %2928 = vmatmul.mubr.bf16.gmra.mrb[0].mxu0 %v516
    %v2929 = vpop.f32.mrb[0].mxu0
    %v2930 = vadd.f32 %v2889, %v2929
    %v2931 = vpop.f32.mrb[0].mxu0
    %v2932 = vadd.f32 %v2891, %v2931
    %v2933 = vpop.f32.mrb[0].mxu0
    %v2934 = vpop.f32.mrb[0].mxu0
    %2935 = vdwg.mxu0
    %v2936 = vmax.f32 %v2561, 0.0
    %v2937 = vmax.f32 %v2563, 0.0
    %v2938 = vmax.f32 %v2684, 0.0
    %v2939 = vmax.f32 %v2686, 0.0
    %v2940 = vmax.f32 %v2807, 0.0
    %v2941 = vmax.f32 %v2809, 0.0
    %v2942 = vmax.f32 %v2930, 0.0
    %v2943 = vmax.f32 %v2932, 0.0
    %v2944 = vpack.c.bf16 %v2936, %v2936
    %v2945 = vpack.c.bf16 %v2937, %v2937
    %v2946 = vpack.c.bf16 %v2938, %v2938
    %v2947 = vpack.c.bf16 %v2939, %v2939
    %v2948 = vpack.c.bf16 %v2940, %v2940
    %v2949 = vpack.c.bf16 %v2941, %v2941
    %v2950 = vpack.c.bf16 %v2942, %v2942
    %v2951 = vpack.c.bf16 %v2943, %v2943
    %v2952 = vld [vmem:[#allocation8] sm:$0xf]
    %v2953 = vld [vmem:[#allocation8 + $0x4] sm:$0xf]
    %v2954 = vld [vmem:[#allocation8 + $0x8] sm:$0xf]
    %v2955 = vld [vmem:[#allocation8 + $0xc] sm:$0xf]
    %v2956 = vld [vmem:[#allocation8 + $0x10] sm:$0xf]
    %v2957 = vld [vmem:[#allocation8 + $0x14] sm:$0xf]
    %v2958 = vld [vmem:[#allocation8 + $0x18] sm:$0xf]
    %v2959 = vld [vmem:[#allocation8 + $0x1c] sm:$0xf]
    %v2960 = vld [vmem:[#allocation8 + $0x20] sm:$0xf]
    %v2961 = vld [vmem:[#allocation8 + $0x24] sm:$0xf]
    %v2962 = vld [vmem:[#allocation8 + $0x28] sm:$0xf]
    %v2963 = vld [vmem:[#allocation8 + $0x2c] sm:$0xf]
    %v2964 = vld [vmem:[#allocation8 + $0x30] sm:$0xf]
    %v2965 = vld [vmem:[#allocation8 + $0x34] sm:$0xf]
    %v2966 = vld [vmem:[#allocation8 + $0x38] sm:$0xf]
    %v2967 = vld [vmem:[#allocation8 + $0x3c] sm:$0xf]
    %v2968 = vld [vmem:[#allocation8 + $0x40] sm:$0xf]
    %v2969 = vld [vmem:[#allocation8 + $0x44] sm:$0xf]
    %v2970 = vld [vmem:[#allocation8 + $0x48] sm:$0xf]
    %v2971 = vld [vmem:[#allocation8 + $0x4c] sm:$0xf]
    %v2972 = vld [vmem:[#allocation8 + $0x50] sm:$0xf]
    %v2973 = vld [vmem:[#allocation8 + $0x54] sm:$0xf]
    %v2974 = vld [vmem:[#allocation8 + $0x58] sm:$0xf]
    %v2975 = vld [vmem:[#allocation8 + $0x5c] sm:$0xf]
    %v2976 = vld [vmem:[#allocation8 + $0x60] sm:$0xf]
    %v2977 = vld [vmem:[#allocation8 + $0x64] sm:$0xf]
    %v2978 = vld [vmem:[#allocation8 + $0x68] sm:$0xf]
    %v2979 = vld [vmem:[#allocation8 + $0x6c] sm:$0xf]
    %v2980 = vld [vmem:[#allocation8 + $0x70] sm:$0xf]
    %v2981 = vld [vmem:[#allocation8 + $0x74] sm:$0xf]
    %v2982 = vld [vmem:[#allocation8 + $0x78] sm:$0xf]
    %v2983 = vld [vmem:[#allocation8 + $0x7c] sm:$0xf]
    %v2984 = vld [vmem:[#allocation8 + $0x80] sm:$0xf]
    %v2985 = vld [vmem:[#allocation8 + $0x84] sm:$0xf]
    %v2986 = vld [vmem:[#allocation8 + $0x88] sm:$0xf]
    %v2987 = vld [vmem:[#allocation8 + $0x8c] sm:$0xf]
    %v2988 = vld [vmem:[#allocation8 + $0x90] sm:$0xf]
    %v2989 = vld [vmem:[#allocation8 + $0x94] sm:$0xf]
    %v2990 = vld [vmem:[#allocation8 + $0x98] sm:$0xf]
    %v2991 = vld [vmem:[#allocation8 + $0x9c] sm:$0xf]
    %v2992 = vld [vmem:[#allocation8 + $0xa0] sm:$0xf]
    %v2993 = vld [vmem:[#allocation8 + $0xa4] sm:$0xf]
    %v2994 = vld [vmem:[#allocation8 + $0xa8] sm:$0xf]
    %v2995 = vld [vmem:[#allocation8 + $0xac] sm:$0xf]
    %v2996 = vld [vmem:[#allocation8 + $0xb0] sm:$0xf]
    %v2997 = vld [vmem:[#allocation8 + $0xb4] sm:$0xf]
    %v2998 = vld [vmem:[#allocation8 + $0xb8] sm:$0xf]
    %v2999 = vld [vmem:[#allocation8 + $0xbc] sm:$0xf]
    %v3000 = vld [vmem:[#allocation8 + $0xc0] sm:$0xf]
    %v3001 = vld [vmem:[#allocation8 + $0xc4] sm:$0xf]
    %v3002 = vld [vmem:[#allocation8 + $0xc8] sm:$0xf]
    %v3003 = vld [vmem:[#allocation8 + $0xcc] sm:$0xf]
    %v3004 = vld [vmem:[#allocation8 + $0xd0] sm:$0xf]
    %v3005 = vld [vmem:[#allocation8 + $0xd4] sm:$0xf]
    %v3006 = vld [vmem:[#allocation8 + $0xd8] sm:$0xf]
    %v3007 = vld [vmem:[#allocation8 + $0xdc] sm:$0xf]
    %v3008 = vld [vmem:[#allocation8 + $0xe0] sm:$0xf]
    %v3009 = vld [vmem:[#allocation8 + $0xe4] sm:$0xf]
    %v3010 = vld [vmem:[#allocation8 + $0xe8] sm:$0xf]
    %v3011 = vld [vmem:[#allocation8 + $0xec] sm:$0xf]
    %v3012 = vld [vmem:[#allocation8 + $0xf0] sm:$0xf]
    %v3013 = vld [vmem:[#allocation8 + $0xf4] sm:$0xf]
    %v3014 = vld [vmem:[#allocation8 + $0xf8] sm:$0xf]
    %v3015 = vld [vmem:[#allocation8 + $0xfc] sm:$0xf]
    %v3016 = vld [vmem:[#allocation8 + $0x100] sm:$0xf]
    %v3017 = vld [vmem:[#allocation8 + $0x104] sm:$0xf]
    %v3018 = vld [vmem:[#allocation8 + $0x108] sm:$0xf]
    %v3019 = vld [vmem:[#allocation8 + $0x10c] sm:$0xf]
    %v3020 = vld [vmem:[#allocation8 + $0x110] sm:$0xf]
    %v3021 = vld [vmem:[#allocation8 + $0x114] sm:$0xf]
    %v3022 = vld [vmem:[#allocation8 + $0x118] sm:$0xf]
    %v3023 = vld [vmem:[#allocation8 + $0x11c] sm:$0xf]
    %v3024 = vld [vmem:[#allocation8 + $0x120] sm:$0xf]
    %v3025 = vld [vmem:[#allocation8 + $0x124] sm:$0xf]
    %v3026 = vld [vmem:[#allocation8 + $0x128] sm:$0xf]
    %v3027 = vld [vmem:[#allocation8 + $0x12c] sm:$0xf]
    %v3028 = vld [vmem:[#allocation8 + $0x130] sm:$0xf]
    %v3029 = vld [vmem:[#allocation8 + $0x134] sm:$0xf]
    %v3030 = vld [vmem:[#allocation8 + $0x138] sm:$0xf]
    %v3031 = vld [vmem:[#allocation8 + $0x13c] sm:$0xf]
    %v3032 = vld [vmem:[#allocation8 + $0x140] sm:$0xf]
    %v3033 = vld [vmem:[#allocation8 + $0x144] sm:$0xf]
    %v3034 = vld [vmem:[#allocation8 + $0x148] sm:$0xf]
    %v3035 = vld [vmem:[#allocation8 + $0x14c] sm:$0xf]
    %v3036 = vld [vmem:[#allocation8 + $0x150] sm:$0xf]
    %v3037 = vld [vmem:[#allocation8 + $0x154] sm:$0xf]
    %v3038 = vld [vmem:[#allocation8 + $0x158] sm:$0xf]
    %v3039 = vld [vmem:[#allocation8 + $0x15c] sm:$0xf]
    %v3040 = vld [vmem:[#allocation8 + $0x160] sm:$0xf]
    %v3041 = vld [vmem:[#allocation8 + $0x164] sm:$0xf]
    %v3042 = vld [vmem:[#allocation8 + $0x168] sm:$0xf]
    %v3043 = vld [vmem:[#allocation8 + $0x16c] sm:$0xf]
    %v3044 = vld [vmem:[#allocation8 + $0x170] sm:$0xf]
    %v3045 = vld [vmem:[#allocation8 + $0x174] sm:$0xf]
    %v3046 = vld [vmem:[#allocation8 + $0x178] sm:$0xf]
    %v3047 = vld [vmem:[#allocation8 + $0x17c] sm:$0xf]
    %v3048 = vld [vmem:[#allocation8 + $0x180] sm:$0xf]
    %v3049 = vld [vmem:[#allocation8 + $0x184] sm:$0xf]
    %v3050 = vld [vmem:[#allocation8 + $0x188] sm:$0xf]
    %v3051 = vld [vmem:[#allocation8 + $0x18c] sm:$0xf]
    %v3052 = vld [vmem:[#allocation8 + $0x190] sm:$0xf]
    %v3053 = vld [vmem:[#allocation8 + $0x194] sm:$0xf]
    %v3054 = vld [vmem:[#allocation8 + $0x198] sm:$0xf]
    %v3055 = vld [vmem:[#allocation8 + $0x19c] sm:$0xf]
    %v3056 = vld [vmem:[#allocation8 + $0x1a0] sm:$0xf]
    %v3057 = vld [vmem:[#allocation8 + $0x1a4] sm:$0xf]
    %v3058 = vld [vmem:[#allocation8 + $0x1a8] sm:$0xf]
    %v3059 = vld [vmem:[#allocation8 + $0x1ac] sm:$0xf]
    %v3060 = vld [vmem:[#allocation8 + $0x1b0] sm:$0xf]
    %v3061 = vld [vmem:[#allocation8 + $0x1b4] sm:$0xf]
    %v3062 = vld [vmem:[#allocation8 + $0x1b8] sm:$0xf]
    %v3063 = vld [vmem:[#allocation8 + $0x1bc] sm:$0xf]
    %v3064 = vld [vmem:[#allocation8 + $0x1c0] sm:$0xf]
    %v3065 = vld [vmem:[#allocation8 + $0x1c4] sm:$0xf]
    %v3066 = vld [vmem:[#allocation8 + $0x1c8] sm:$0xf]
    %v3067 = vld [vmem:[#allocation8 + $0x1cc] sm:$0xf]
    %v3068 = vld [vmem:[#allocation8 + $0x1d0] sm:$0xf]
    %v3069 = vld [vmem:[#allocation8 + $0x1d4] sm:$0xf]
    %v3070 = vld [vmem:[#allocation8 + $0x1d8] sm:$0xf]
    %v3071 = vld [vmem:[#allocation8 + $0x1dc] sm:$0xf]
    %v3072 = vld [vmem:[#allocation8 + $0x1e0] sm:$0xf]
    %v3073 = vld [vmem:[#allocation8 + $0x1e4] sm:$0xf]
    %v3074 = vld [vmem:[#allocation8 + $0x1e8] sm:$0xf]
    %v3075 = vld [vmem:[#allocation8 + $0x1ec] sm:$0xf]
    %v3076 = vld [vmem:[#allocation8 + $0x1f0] sm:$0xf]
    %v3077 = vld [vmem:[#allocation8 + $0x1f4] sm:$0xf]
    %v3078 = vld [vmem:[#allocation8 + $0x1f8] sm:$0xf]
    %v3079 = vld [vmem:[#allocation8 + $0x1fc] sm:$0xf]
    %v3208 = vunpack.c.l.b16 %v2952
    %v3209 = vunpack.c.l.b16 %v2953
    %v3210 = vunpack.c.l.b16 %v2954
    %v3211 = vunpack.c.l.b16 %v2955
    %v3212 = vunpack.c.l.b16 %v2956
    %v3213 = vunpack.c.l.b16 %v2957
    %v3214 = vunpack.c.l.b16 %v2958
    %v3215 = vunpack.c.l.b16 %v2959
    %v3216 = vunpack.c.l.b16 %v2960
    %v3217 = vunpack.c.l.b16 %v2961
    %v3218 = vunpack.c.l.b16 %v2962
    %v3219 = vunpack.c.l.b16 %v2963
    %v3220 = vunpack.c.l.b16 %v2964
    %v3221 = vunpack.c.l.b16 %v2965
    %v3222 = vunpack.c.l.b16 %v2966
    %v3223 = vunpack.c.l.b16 %v2967
    %v3224 = vunpack.c.l.b16 %v2968
    %v3225 = vunpack.c.l.b16 %v2969
    %v3226 = vunpack.c.l.b16 %v2970
    %v3227 = vunpack.c.l.b16 %v2971
    %v3228 = vunpack.c.l.b16 %v2972
    %v3229 = vunpack.c.l.b16 %v2973
    %v3230 = vunpack.c.l.b16 %v2974
    %v3231 = vunpack.c.l.b16 %v2975
    %v3232 = vunpack.c.l.b16 %v2976
    %v3233 = vunpack.c.l.b16 %v2977
    %v3234 = vunpack.c.l.b16 %v2978
    %v3235 = vunpack.c.l.b16 %v2979
    %v3236 = vunpack.c.l.b16 %v2980
    %v3237 = vunpack.c.l.b16 %v2981
    %v3238 = vunpack.c.l.b16 %v2982
    %v3239 = vunpack.c.l.b16 %v2983
    %v3240 = vunpack.c.l.b16 %v2984
    %v3241 = vunpack.c.l.b16 %v2985
    %v3242 = vunpack.c.l.b16 %v2986
    %v3243 = vunpack.c.l.b16 %v2987
    %v3244 = vunpack.c.l.b16 %v2988
    %v3245 = vunpack.c.l.b16 %v2989
    %v3246 = vunpack.c.l.b16 %v2990
    %v3247 = vunpack.c.l.b16 %v2991
    %v3248 = vunpack.c.l.b16 %v2992
    %v3249 = vunpack.c.l.b16 %v2993
    %v3250 = vunpack.c.l.b16 %v2994
    %v3251 = vunpack.c.l.b16 %v2995
    %v3252 = vunpack.c.l.b16 %v2996
    %v3253 = vunpack.c.l.b16 %v2997
    %v3254 = vunpack.c.l.b16 %v2998
    %v3255 = vunpack.c.l.b16 %v2999
    %v3256 = vunpack.c.l.b16 %v3000
    %v3257 = vunpack.c.l.b16 %v3001
    %v3258 = vunpack.c.l.b16 %v3002
    %v3259 = vunpack.c.l.b16 %v3003
    %v3260 = vunpack.c.l.b16 %v3004
    %v3261 = vunpack.c.l.b16 %v3005
    %v3262 = vunpack.c.l.b16 %v3006
    %v3263 = vunpack.c.l.b16 %v3007
    %v3264 = vunpack.c.l.b16 %v3008
    %v3265 = vunpack.c.l.b16 %v3009
    %v3266 = vunpack.c.l.b16 %v3010
    %v3267 = vunpack.c.l.b16 %v3011
    %v3268 = vunpack.c.l.b16 %v3012
    %v3269 = vunpack.c.l.b16 %v3013
    %v3270 = vunpack.c.l.b16 %v3014
    %v3271 = vunpack.c.l.b16 %v3015
    %v3272 = vunpack.c.l.b16 %v3016
    %v3273 = vunpack.c.l.b16 %v3017
    %v3274 = vunpack.c.l.b16 %v3018
    %v3275 = vunpack.c.l.b16 %v3019
    %v3276 = vunpack.c.l.b16 %v3020
    %v3277 = vunpack.c.l.b16 %v3021
    %v3278 = vunpack.c.l.b16 %v3022
    %v3279 = vunpack.c.l.b16 %v3023
    %v3280 = vunpack.c.l.b16 %v3024
    %v3281 = vunpack.c.l.b16 %v3025
    %v3282 = vunpack.c.l.b16 %v3026
    %v3283 = vunpack.c.l.b16 %v3027
    %v3284 = vunpack.c.l.b16 %v3028
    %v3285 = vunpack.c.l.b16 %v3029
    %v3286 = vunpack.c.l.b16 %v3030
    %v3287 = vunpack.c.l.b16 %v3031
    %v3288 = vunpack.c.l.b16 %v3032
    %v3289 = vunpack.c.l.b16 %v3033
    %v3290 = vunpack.c.l.b16 %v3034
    %v3291 = vunpack.c.l.b16 %v3035
    %v3292 = vunpack.c.l.b16 %v3036
    %v3293 = vunpack.c.l.b16 %v3037
    %v3294 = vunpack.c.l.b16 %v3038
    %v3295 = vunpack.c.l.b16 %v3039
    %v3296 = vunpack.c.l.b16 %v3040
    %v3297 = vunpack.c.l.b16 %v3041
    %v3298 = vunpack.c.l.b16 %v3042
    %v3299 = vunpack.c.l.b16 %v3043
    %v3300 = vunpack.c.l.b16 %v3044
    %v3301 = vunpack.c.l.b16 %v3045
    %v3302 = vunpack.c.l.b16 %v3046
    %v3303 = vunpack.c.l.b16 %v3047
    %v3304 = vunpack.c.l.b16 %v3048
    %v3305 = vunpack.c.l.b16 %v3049
    %v3306 = vunpack.c.l.b16 %v3050
    %v3307 = vunpack.c.l.b16 %v3051
    %v3308 = vunpack.c.l.b16 %v3052
    %v3309 = vunpack.c.l.b16 %v3053
    %v3310 = vunpack.c.l.b16 %v3054
    %v3311 = vunpack.c.l.b16 %v3055
    %v3312 = vunpack.c.l.b16 %v3056
    %v3313 = vunpack.c.l.b16 %v3057
    %v3314 = vunpack.c.l.b16 %v3058
    %v3315 = vunpack.c.l.b16 %v3059
    %v3316 = vunpack.c.l.b16 %v3060
    %v3317 = vunpack.c.l.b16 %v3061
    %v3318 = vunpack.c.l.b16 %v3062
    %v3319 = vunpack.c.l.b16 %v3063
    %v3320 = vunpack.c.l.b16 %v3064
    %v3321 = vunpack.c.l.b16 %v3065
    %v3322 = vunpack.c.l.b16 %v3066
    %v3323 = vunpack.c.l.b16 %v3067
    %v3324 = vunpack.c.l.b16 %v3068
    %v3325 = vunpack.c.l.b16 %v3069
    %v3326 = vunpack.c.l.b16 %v3070
    %v3327 = vunpack.c.l.b16 %v3071
    %v3328 = vunpack.c.l.b16 %v3072
    %v3329 = vunpack.c.l.b16 %v3073
    %v3330 = vunpack.c.l.b16 %v3074
    %v3331 = vunpack.c.l.b16 %v3075
    %v3332 = vunpack.c.l.b16 %v3076
    %v3333 = vunpack.c.l.b16 %v3077
    %v3334 = vunpack.c.l.b16 %v3078
    %v3335 = vunpack.c.l.b16 %v3079
    %v3336 = vpack.c.b16 %v3209, %v3208
    %v3337 = vpack.c.b16 %v3211, %v3210
    %v3338 = vpack.c.b16 %v3213, %v3212
    %v3339 = vpack.c.b16 %v3215, %v3214
    %v3340 = vpack.c.b16 %v3217, %v3216
    %v3341 = vpack.c.b16 %v3219, %v3218
    %v3342 = vpack.c.b16 %v3221, %v3220
    %v3343 = vpack.c.b16 %v3223, %v3222
    %v3344 = vpack.c.b16 %v3225, %v3224
    %v3345 = vpack.c.b16 %v3227, %v3226
    %v3346 = vpack.c.b16 %v3229, %v3228
    %v3347 = vpack.c.b16 %v3231, %v3230
    %v3348 = vpack.c.b16 %v3233, %v3232
    %v3349 = vpack.c.b16 %v3235, %v3234
    %v3350 = vpack.c.b16 %v3237, %v3236
    %v3351 = vpack.c.b16 %v3239, %v3238
    %v3352 = vpack.c.b16 %v3241, %v3240
    %v3353 = vpack.c.b16 %v3243, %v3242
    %v3354 = vpack.c.b16 %v3245, %v3244
    %v3355 = vpack.c.b16 %v3247, %v3246
    %v3356 = vpack.c.b16 %v3249, %v3248
    %v3357 = vpack.c.b16 %v3251, %v3250
    %v3358 = vpack.c.b16 %v3253, %v3252
    %v3359 = vpack.c.b16 %v3255, %v3254
    %v3360 = vpack.c.b16 %v3257, %v3256
    %v3361 = vpack.c.b16 %v3259, %v3258
    %v3362 = vpack.c.b16 %v3261, %v3260
    %v3363 = vpack.c.b16 %v3263, %v3262
    %v3364 = vpack.c.b16 %v3265, %v3264
    %v3365 = vpack.c.b16 %v3267, %v3266
    %v3366 = vpack.c.b16 %v3269, %v3268
    %v3367 = vpack.c.b16 %v3271, %v3270
    %v3368 = vpack.c.b16 %v3273, %v3272
    %v3369 = vpack.c.b16 %v3275, %v3274
    %v3370 = vpack.c.b16 %v3277, %v3276
    %v3371 = vpack.c.b16 %v3279, %v3278
    %v3372 = vpack.c.b16 %v3281, %v3280
    %v3373 = vpack.c.b16 %v3283, %v3282
    %v3374 = vpack.c.b16 %v3285, %v3284
    %v3375 = vpack.c.b16 %v3287, %v3286
    %v3376 = vpack.c.b16 %v3289, %v3288
    %v3377 = vpack.c.b16 %v3291, %v3290
    %v3378 = vpack.c.b16 %v3293, %v3292
    %v3379 = vpack.c.b16 %v3295, %v3294
    %v3380 = vpack.c.b16 %v3297, %v3296
    %v3381 = vpack.c.b16 %v3299, %v3298
    %v3382 = vpack.c.b16 %v3301, %v3300
    %v3383 = vpack.c.b16 %v3303, %v3302
    %v3384 = vpack.c.b16 %v3305, %v3304
    %v3385 = vpack.c.b16 %v3307, %v3306
    %v3386 = vpack.c.b16 %v3309, %v3308
    %v3387 = vpack.c.b16 %v3311, %v3310
    %v3388 = vpack.c.b16 %v3313, %v3312
    %v3389 = vpack.c.b16 %v3315, %v3314
    %v3390 = vpack.c.b16 %v3317, %v3316
    %v3391 = vpack.c.b16 %v3319, %v3318
    %v3392 = vpack.c.b16 %v3321, %v3320
    %v3393 = vpack.c.b16 %v3323, %v3322
    %v3394 = vpack.c.b16 %v3325, %v3324
    %v3395 = vpack.c.b16 %v3327, %v3326
    %v3396 = vpack.c.b16 %v3329, %v3328
    %v3397 = vpack.c.b16 %v3331, %v3330
    %v3398 = vpack.c.b16 %v3333, %v3332
    %v3399 = vpack.c.b16 %v3335, %v3334
    %3464 = vmatprep.subr.bf16.mxu0 0
    %3465 = vmatpush1.bf16.msra.mxu0 %v3336
    %3466 = vmatprep.subr.bf16.mxu0 0
    %3467 = vmatpush1.bf16.msra.mxu0 %v3337
    %3468 = vmatprep.subr.bf16.mxu0 0
    %3469 = vmatpush1.bf16.msra.mxu0 %v3338
    %3470 = vmatprep.subr.bf16.mxu0 0
    %3471 = vmatpush1.bf16.msra.mxu0 %v3339
    %3472 = vmatprep.subr.bf16.mxu0 0
    %3473 = vmatpush1.bf16.msra.mxu0 %v3340
    %3474 = vmatprep.subr.bf16.mxu0 0
    %3475 = vmatpush1.bf16.msra.mxu0 %v3341
    %3476 = vmatprep.subr.bf16.mxu0 0
    %3477 = vmatpush1.bf16.msra.mxu0 %v3342
    %3478 = vmatprep.subr.bf16.mxu0 0
    %3479 = vmatpush1.bf16.msra.mxu0 %v3343
    %3480 = vmatprep.subr.bf16.mxu0 0
    %3481 = vmatpush1.bf16.msra.mxu0 %v3344
    %3482 = vmatprep.subr.bf16.mxu0 0
    %3483 = vmatpush1.bf16.msra.mxu0 %v3345
    %3484 = vmatprep.subr.bf16.mxu0 0
    %3485 = vmatpush1.bf16.msra.mxu0 %v3346
    %3486 = vmatprep.subr.bf16.mxu0 0
    %3487 = vmatpush1.bf16.msra.mxu0 %v3347
    %3488 = vmatprep.subr.bf16.mxu0 0
    %3489 = vmatpush1.bf16.msra.mxu0 %v3348
    %3490 = vmatprep.subr.bf16.mxu0 0
    %3491 = vmatpush1.bf16.msra.mxu0 %v3349
    %3492 = vmatprep.subr.bf16.mxu0 0
    %3493 = vmatpush1.bf16.msra.mxu0 %v3350
    %3494 = vmatprep.subr.bf16.mxu0 0
    %3495 = vmatpush1.bf16.msra.mxu0 %v3351
    %3496 = vmatprep.mubr.bf16.mxu0 %v2945
    %3497 = vmatmul.mubr.bf16.gmra.mrb[0].mxu0 %v2944
    %v3498 = vpop.f32.mrb[0].mxu0
    %v3499 = vadd.f32 0.0, %v3498
    %v3500 = vpop.f32.mrb[0].mxu0
    %v3501 = vpop.f32.mrb[0].mxu0
    %v3502 = vpop.f32.mrb[0].mxu0
    %3503 = vdwg.mxu0
    %3504 = vmatprep.subr.bf16.mxu0 0
    %3505 = vmatpush1.bf16.msra.mxu0 %v3352
    %3506 = vmatprep.subr.bf16.mxu0 0
    %3507 = vmatpush1.bf16.msra.mxu0 %v3353
    %3508 = vmatprep.subr.bf16.mxu0 0
    %3509 = vmatpush1.bf16.msra.mxu0 %v3354
    %3510 = vmatprep.subr.bf16.mxu0 0
    %3511 = vmatpush1.bf16.msra.mxu0 %v3355
    %3512 = vmatprep.subr.bf16.mxu0 0
    %3513 = vmatpush1.bf16.msra.mxu0 %v3356
    %3514 = vmatprep.subr.bf16.mxu0 0
    %3515 = vmatpush1.bf16.msra.mxu0 %v3357
    %3516 = vmatprep.subr.bf16.mxu0 0
    %3517 = vmatpush1.bf16.msra.mxu0 %v3358
    %3518 = vmatprep.subr.bf16.mxu0 0
    %3519 = vmatpush1.bf16.msra.mxu0 %v3359
    %3520 = vmatprep.subr.bf16.mxu0 0
    %3521 = vmatpush1.bf16.msra.mxu0 %v3360
    %3522 = vmatprep.subr.bf16.mxu0 0
    %3523 = vmatpush1.bf16.msra.mxu0 %v3361
    %3524 = vmatprep.subr.bf16.mxu0 0
    %3525 = vmatpush1.bf16.msra.mxu0 %v3362
    %3526 = vmatprep.subr.bf16.mxu0 0
    %3527 = vmatpush1.bf16.msra.mxu0 %v3363
    %3528 = vmatprep.subr.bf16.mxu0 0
    %3529 = vmatpush1.bf16.msra.mxu0 %v3364
    %3530 = vmatprep.subr.bf16.mxu0 0
    %3531 = vmatpush1.bf16.msra.mxu0 %v3365
    %3532 = vmatprep.subr.bf16.mxu0 0
    %3533 = vmatpush1.bf16.msra.mxu0 %v3366
    %3534 = vmatprep.subr.bf16.mxu0 0
    %3535 = vmatpush1.bf16.msra.mxu0 %v3367
    %3536 = vmatprep.mubr.bf16.mxu0 %v2947
    %3537 = vmatmul.mubr.bf16.gmra.mrb[0].mxu0 %v2946
    %v3538 = vpop.f32.mrb[0].mxu0
    %v3539 = vadd.f32 %v3499, %v3538
    %v3540 = vpop.f32.mrb[0].mxu0
    %v3541 = vpop.f32.mrb[0].mxu0
    %v3542 = vpop.f32.mrb[0].mxu0
    %3543 = vdwg.mxu0
    %3544 = vmatprep.subr.bf16.mxu0 0
    %3545 = vmatpush1.bf16.msra.mxu0 %v3368
    %3546 = vmatprep.subr.bf16.mxu0 0
    %3547 = vmatpush1.bf16.msra.mxu0 %v3369
    %3548 = vmatprep.subr.bf16.mxu0 0
    %3549 = vmatpush1.bf16.msra.mxu0 %v3370
    %3550 = vmatprep.subr.bf16.mxu0 0
    %3551 = vmatpush1.bf16.msra.mxu0 %v3371
    %3552 = vmatprep.subr.bf16.mxu0 0
    %3553 = vmatpush1.bf16.msra.mxu0 %v3372
    %3554 = vmatprep.subr.bf16.mxu0 0
    %3555 = vmatpush1.bf16.msra.mxu0 %v3373
    %3556 = vmatprep.subr.bf16.mxu0 0
    %3557 = vmatpush1.bf16.msra.mxu0 %v3374
    %3558 = vmatprep.subr.bf16.mxu0 0
    %3559 = vmatpush1.bf16.msra.mxu0 %v3375
    %3560 = vmatprep.subr.bf16.mxu0 0
    %3561 = vmatpush1.bf16.msra.mxu0 %v3376
    %3562 = vmatprep.subr.bf16.mxu0 0
    %3563 = vmatpush1.bf16.msra.mxu0 %v3377
    %3564 = vmatprep.subr.bf16.mxu0 0
    %3565 = vmatpush1.bf16.msra.mxu0 %v3378
    %3566 = vmatprep.subr.bf16.mxu0 0
    %3567 = vmatpush1.bf16.msra.mxu0 %v3379
    %3568 = vmatprep.subr.bf16.mxu0 0
    %3569 = vmatpush1.bf16.msra.mxu0 %v3380
    %3570 = vmatprep.subr.bf16.mxu0 0
    %3571 = vmatpush1.bf16.msra.mxu0 %v3381
    %3572 = vmatprep.subr.bf16.mxu0 0
    %3573 = vmatpush1.bf16.msra.mxu0 %v3382
    %3574 = vmatprep.subr.bf16.mxu0 0
    %3575 = vmatpush1.bf16.msra.mxu0 %v3383
    %3576 = vmatprep.mubr.bf16.mxu0 %v2949
    %3577 = vmatmul.mubr.bf16.gmra.mrb[0].mxu0 %v2948
    %v3578 = vpop.f32.mrb[0].mxu0
    %v3579 = vadd.f32 %v3539, %v3578
    %v3580 = vpop.f32.mrb[0].mxu0
    %v3581 = vpop.f32.mrb[0].mxu0
    %v3582 = vpop.f32.mrb[0].mxu0
    %3583 = vdwg.mxu0
    %3584 = vmatprep.subr.bf16.mxu0 0
    %3585 = vmatpush1.bf16.msra.mxu0 %v3384
    %3586 = vmatprep.subr.bf16.mxu0 0
    %3587 = vmatpush1.bf16.msra.mxu0 %v3385
    %3588 = vmatprep.subr.bf16.mxu0 0
    %3589 = vmatpush1.bf16.msra.mxu0 %v3386
    %3590 = vmatprep.subr.bf16.mxu0 0
    %3591 = vmatpush1.bf16.msra.mxu0 %v3387
    %3592 = vmatprep.subr.bf16.mxu0 0
    %3593 = vmatpush1.bf16.msra.mxu0 %v3388
    %3594 = vmatprep.subr.bf16.mxu0 0
    %3595 = vmatpush1.bf16.msra.mxu0 %v3389
    %3596 = vmatprep.subr.bf16.mxu0 0
    %3597 = vmatpush1.bf16.msra.mxu0 %v3390
    %3598 = vmatprep.subr.bf16.mxu0 0
    %3599 = vmatpush1.bf16.msra.mxu0 %v3391
    %3600 = vmatprep.subr.bf16.mxu0 0
    %3601 = vmatpush1.bf16.msra.mxu0 %v3392
    %3602 = vmatprep.subr.bf16.mxu0 0
    %3603 = vmatpush1.bf16.msra.mxu0 %v3393
    %3604 = vmatprep.subr.bf16.mxu0 0
    %3605 = vmatpush1.bf16.msra.mxu0 %v3394
    %3606 = vmatprep.subr.bf16.mxu0 0
    %3607 = vmatpush1.bf16.msra.mxu0 %v3395
    %3608 = vmatprep.subr.bf16.mxu0 0
    %3609 = vmatpush1.bf16.msra.mxu0 %v3396
    %3610 = vmatprep.subr.bf16.mxu0 0
    %3611 = vmatpush1.bf16.msra.mxu0 %v3397
    %3612 = vmatprep.subr.bf16.mxu0 0
    %3613 = vmatpush1.bf16.msra.mxu0 %v3398
    %3614 = vmatprep.subr.bf16.mxu0 0
    %3615 = vmatpush1.bf16.msra.mxu0 %v3399
    %3616 = vmatprep.mubr.bf16.mxu0 %v2951
    %3617 = vmatmul.mubr.bf16.gmra.mrb[0].mxu0 %v2950
    %v3618 = vpop.f32.mrb[0].mxu0
    %v3619 = vadd.f32 %v3579, %v3618
    %v3620 = vpop.f32.mrb[0].mxu0
    %v3621 = vpop.f32.mrb[0].mxu0
    %v3622 = vpop.f32.mrb[0].mxu0
    %3623 = vdwg.mxu0
    %v3624 = vld [vmem:[#allocation2] sm:$0x1]
    %v3626 = vlaneseq
    %v3627 = vshrl.u32 %v3626, 7
    %v3628 = vsub.s32 0, %v3627
    %v3629 = vrot.slane %v3624, %v3628
    %v3631 = vadd.f32 %v3619, %v3629
    %v3632 = vmax.f32 %v3631, 0.0
    %v3633 = vand.u32 2147483647, %v3631
    %v3634 = vsub.f32 0.0, %v3633
    %v3635 = vmul.f32 %v3634, 1.442695
    %v3636 = vpow.pop %v3635
    %v3637 = vadd.f32 %v3636, 1.0
    %v3638 = vlog2.pop %v3637
    %v3639 = vmul.f32 %v3638, 0.6931472
    %v3640 = vadd.f32 %v3632, %v3639
    %v3641 = vsub.f32 0.0, %v3640
    %vm3642 = vcmask 7168
    %3643 = vst.msk [vmem:[%s5] sm:$0xff] %vm3642, %v3641
    %v3644 = vsub.f32 %v3631, %v3640
    %3646 = vrot.lane.b32.xlu0 %v3644, 1
    %v3647 = vpop.permute.xlu0 %3646
    %vm3649 = vcmask 15368
    %3650 = vst.msk [vmem:[%s5] sm:$0xff] %vm3649, %v3647
    // Predicated region
    $region38: #{tpu_custom_call.1} parent=1 // pred_check
      _
    $region39: #{tpu_custom_call.1} parent=1 // pred_check_branch
      %3652 = sbr.rel (0) target = $region41
    $region40: #{tpu_custom_call.1} parent=1 // pred_region
      _
    $region41: #{tpu_custom_call.1} parent=1 // pred_fallthru
      _
    // Predicated region
    $region42: #{tpu_custom_call.1} parent=1 // pred_check
      _
    $region43: #{tpu_custom_call.1} parent=1 // pred_check_branch
      %3654 = sbr.rel (0) target = $region45
    $region44: #{tpu_custom_call.1} parent=1 // pred_region
      _
    $region45: #{tpu_custom_call.1} parent=1 // pred_fallthru
      _
    %3655 = vsyncpa [#allocation4], 1
    %3656 = vsyncpa [#allocation6], 1
    %3657 = vsyncpa [#allocation9], 1

</llo_original>
